<compile_context>
chip_gen: v6e
topology: v6e:2x2x1
jax: 0.10.0
libtpu: 0.0.40
codegen_flags: <defaults>
</compile_context>

<pallas_src>
import functools

import jax
import jax.numpy as jnp
from jax.experimental import pallas as pl
from jax.experimental.pallas import tpu as pltpu

_LANE = 128
_SUBLANE = 8


def _hydra_kernel(x_ref, wq_ref, wk_ref, wv_ref, bq_ref, bk_ref, bv_ref,
                  wo_ref, bo_ref, o_ref, *, seq_len):
    """One grid step: m = b_blk * seq_len flattened tokens (whole sequences)."""
    m, d = x_ref.shape
    b_blk = m // seq_len

    x = x_ref[...]                                    # (M, D) bf16 MXU operand

    # ---- K / V first: form the per-sequence kv token-sum, then K/V die -----
    k = jnp.dot(x, wk_ref[...], preferred_element_type=jnp.float32) + bk_ref[...]
    v = jnp.dot(x, wv_ref[...], preferred_element_type=jnp.float32) + bv_ref[...]
    # L2-normalize along features (rsqrt -> EUP). No epsilon, matching torch.
    k = k * jax.lax.rsqrt(jnp.sum(k * k, axis=-1, keepdims=True))
    # TODO(synk): mask (k.masked_fill) / dropout branches are no-ops here
    # (mask=None, dropout p=0.0 in the reference forward).
    kv = jnp.sum((k * v).reshape(b_blk, seq_len, d), axis=1, keepdims=True)  # (b_blk,1,D) f32

    # ---- Q last (lower peak f32 liveness), normalize, apply, project -------
    q = jnp.dot(x, wq_ref[...], preferred_element_type=jnp.float32) + bq_ref[...]
    q = q * jax.lax.rsqrt(jnp.sum(q * q, axis=-1, keepdims=True))

    # Broadcasted kv * q in bf16 (halves the big elementwise intermediate);
    # the output projection consumes bf16 MXU operands anyway.
    out = (kv.astype(jnp.bfloat16) *
           q.astype(jnp.bfloat16).reshape(b_blk, seq_len, d)).reshape(m, d)
    y = jnp.dot(out, wo_ref[...], preferred_element_type=jnp.float32) + bo_ref[...]
    o_ref[...] = y.astype(o_ref.dtype)


def _pick_b_blk(B, T, target_rows):
    """Smallest/largest divisor of B with b_blk*T a sublane multiple, preferring
    >= 2 grid steps (v7x's two TensorCores) and <= target_rows rows per step."""
    divisors = [d for d in range(1, B + 1) if B % d == 0]
    valid = [d for d in divisors if (d * T) % _SUBLANE == 0]
    if not valid:
        # No sublane-aligned split exists; a full-array block is exempt from
        # the (8, 128) rule.
        return B
    multi = [d for d in valid if B // d >= 2]
    cand = multi if multi else valid
    fitting = [d for d in cand if d * T <= target_rows]
    return max(fitting) if fitting else min(cand)


def hydra_attention(x, w_qkv, b_qkv, w_out, b_out, *, b_blk=None):
    """x: (B, T, D); w_qkv: (D, 3D); b_qkv: (3D,); w_out: (D, D); b_out: (D,).

    Weights are stored pre-transposed as (in_features, out_features), so the
    kernel computes y = x @ W + b (== torch's x @ W_t.T + b).
    """
    B, T, D = x.shape
    out_dtype = x.dtype

    # ---- lane-pad the feature dim so every load/store is lane-dense --------
    d_pad = max(_LANE, -(-D // _LANE) * _LANE)
    pad_d = d_pad - D

    # Split the fused qkv weight into three lane-aligned (D, D) operands and
    # zero-pad to d_pad (zeros change neither the norms, the kv sum, nor the
    # real output columns).
    w_q, w_k, w_v = w_qkv[:, :D], w_qkv[:, D:2 * D], w_qkv[:, 2 * D:]

    def pad_mat(w):
        return jnp.pad(w, ((0, pad_d), (0, pad_d))).astype(jnp.bfloat16)

    def pad_bias(b):
        return jnp.pad(b, (0, pad_d)).reshape(1, d_pad).astype(jnp.float32)

    w_q, w_k, w_v, w_o = pad_mat(w_q), pad_mat(w_k), pad_mat(w_v), pad_mat(w_out)
    b_q = pad_bias(b_qkv[:D])
    b_k = pad_bias(b_qkv[D:2 * D])
    b_v = pad_bias(b_qkv[2 * D:])
    b_o = pad_bias(b_out)

    x_flat = jnp.pad(x.reshape(B * T, D), ((0, 0), (0, pad_d))).astype(jnp.bfloat16)

    # ---- per-step row budget: keep the per-step activation slab ~<= 24 MiB
    # (x dbl-buffered bf16 + out dbl-buffered f32 + ~4 f32 (m_blk, D) temps).
    bytes_per_row = d_pad * (2 * 2 + 2 * 4 + 4 * 4)
    target_rows = max(_SUBLANE, min(2048, (24 << 20) // max(1, bytes_per_row)))
    if b_blk is None:
        b_blk = _pick_b_blk(B, T, target_rows)
    assert B % b_blk == 0, "b_blk must divide B"
    m_blk = b_blk * T
    # TODO(synk): for very long T (a single sequence over the VMEM budget) add
    # a second grid axis over T with a VMEM kv-accumulator scratch (two-phase
    # accumulate-then-apply); not needed at these shapes.

    # ---- VMEM budget: raise the scoped limit above the v5e 16 MiB default --
    try:
        vmem_cap = pltpu.get_tpu_info().vmem_capacity_bytes
    except Exception:
        vmem_cap = 64 << 20
    vmem_limit = int(min(100 << 20, 0.8 * vmem_cap))

    kernel = functools.partial(_hydra_kernel, seq_len=T)
    grid = (B // b_blk,)

    def build_specs(single_buffer_weights):
        if single_buffer_weights:
            # Grid-invariant operands: one VMEM copy, no double-buffering.
            wmat_spec = pl.BlockSpec((d_pad, d_pad), lambda i: (0, 0),
                                     pipeline_mode=pl.Buffered(1))
            bias_spec = pl.BlockSpec((1, d_pad), lambda i: (0, 0),
                                     pipeline_mode=pl.Buffered(1))
        else:
            wmat_spec = pl.BlockSpec((d_pad, d_pad), lambda i: (0, 0))
            bias_spec = pl.BlockSpec((1, d_pad), lambda i: (0, 0))
        in_specs = [
            pl.BlockSpec((m_blk, d_pad), lambda i: (i, 0)),   # x, flattened rows
            wmat_spec, wmat_spec, wmat_spec,                  # W_q, W_k, W_v
            bias_spec, bias_spec, bias_spec,                  # b_q, b_k, b_v
            wmat_spec,                                        # W_out
            bias_spec,                                        # b_out
        ]
        out_specs = pl.BlockSpec((m_blk, d_pad), lambda i: (i, 0))
        return in_specs, out_specs

    def run(single_buffer_weights):
        in_specs, out_specs = build_specs(single_buffer_weights)
        return pl.pallas_call(
            kernel,
            out_shape=jax.ShapeDtypeStruct((B * T, d_pad), out_dtype),
            grid_spec=pltpu.PrefetchScalarGridSpec(
                num_scalar_prefetch=0,
                grid=grid,
                in_specs=in_specs,
                out_specs=out_specs,
            ),
            compiler_params=pltpu.CompilerParams(
                dimension_semantics=("parallel",),
                vmem_limit_bytes=vmem_limit,
            ),
        )(x_flat, w_q, w_k, w_v, b_q, b_k, b_v, w_o, b_o)

    try:
        y_flat = run(single_buffer_weights=True)
    except Exception:
        # Fallback for jax versions without pipeline_mode / Buffered(1) support.
        y_flat = run(single_buffer_weights=False)

    return y_flat.reshape(B, T, d_pad)[..., :D]


def hydra_attention_ref(x, w_qkv, b_qkv, w_out, b_out):
    """Pure-JAX f32 reference mirroring the PyTorch forward."""
    D = x.shape[-1]
    qkv = x @ w_qkv + b_qkv
    q, k, v = qkv[..., :D], qkv[..., D:2 * D], qkv[..., 2 * D:]
    q = q / jnp.linalg.norm(q, axis=-1, keepdims=True)
    k = k / jnp.linalg.norm(k, axis=-1, keepdims=True)
    kvw = k * v
    out = jnp.sum(kvw, axis=-2, keepdims=True) * q
    return out @ w_out + b_out


if __name__ == "__main__":
    B, T, D = 2, 8, 32  # small shapes: batch=2, seq=8, d_model=32

    key = jax.random.PRNGKey(0)
    kx, k1, k2, k3, k4 = jax.random.split(key, 5)

    x = jax.random.normal(kx, (B, T, D), dtype=jnp.float32)

    # Parameter init (shapes match nn.Linear(d_model, 3*d_model) and
    # nn.Linear(d_model, d_model)); stored pre-transposed as (in, out).
    w_qkv = jax.random.normal(k1, (D, 3 * D), dtype=jnp.float32) * (1.0 / jnp.sqrt(D))
    b_qkv = jax.random.normal(k2, (3 * D,), dtype=jnp.float32) * 0.02
    w_out = jax.random.normal(k3, (D, D), dtype=jnp.float32) * (1.0 / jnp.sqrt(D))
    b_out = jax.random.normal(k4, (D,), dtype=jnp.float32) * 0.02

    y = hydra_attention(x, w_qkv, b_qkv, w_out, b_out)
    y = jax.block_until_ready(y)

    y_ref = hydra_attention_ref(x, w_qkv, b_qkv, w_out, b_out)
    assert y.shape == (B, T, D)
    # bf16 MXU operands with f32 accumulation -> compare at bf16-level tolerance.
    assert jnp.allclose(y, y_ref, atol=3e-2, rtol=3e-2), (
        f"max abs err = {jnp.max(jnp.abs(y - y_ref))}"
    )

    print("KERNEL_OK")
</pallas_src>

<mosaic_0001>
module attributes {stable_mosaic.version = 11 : i64} {
  func.func @_hydra_kernel(%arg0: i32, %arg1: memref<8x128xbf16, #tpu.memory_space<vmem>>, %arg2: memref<128x128xbf16, #tpu.memory_space<vmem>>, %arg3: memref<128x128xbf16, #tpu.memory_space<vmem>>, %arg4: memref<128x128xbf16, #tpu.memory_space<vmem>>, %arg5: memref<1x128xf32, #tpu.memory_space<vmem>>, %arg6: memref<1x128xf32, #tpu.memory_space<vmem>>, %arg7: memref<1x128xf32, #tpu.memory_space<vmem>>, %arg8: memref<128x128xbf16, #tpu.memory_space<vmem>>, %arg9: memref<1x128xf32, #tpu.memory_space<vmem>>, %arg10: memref<8x128xf32, #tpu.memory_space<vmem>>) attributes {dimension_semantics = [#tpu.dimension_semantics<parallel>], iteration_bounds = array<i64: 2>, scalar_prefetch = 0 : i64, scratch_operands = 0 : i64, tpu.core_type = #tpu.core_type<tc>, window_params = [{transform_indices = @transform_0, window_bounds = array<i64: 8, 128>}, {pipeline_mode = #tpu.pipeline_mode<synchronous>, transform_indices = @transform_1, window_bounds = array<i64: 128, 128>}, {pipeline_mode = #tpu.pipeline_mode<synchronous>, transform_indices = @transform_2, window_bounds = array<i64: 128, 128>}, {pipeline_mode = #tpu.pipeline_mode<synchronous>, transform_indices = @transform_3, window_bounds = array<i64: 128, 128>}, {pipeline_mode = #tpu.pipeline_mode<synchronous>, transform_indices = @transform_4, window_bounds = array<i64: 1, 128>}, {pipeline_mode = #tpu.pipeline_mode<synchronous>, transform_indices = @transform_5, window_bounds = array<i64: 1, 128>}, {pipeline_mode = #tpu.pipeline_mode<synchronous>, transform_indices = @transform_6, window_bounds = array<i64: 1, 128>}, {pipeline_mode = #tpu.pipeline_mode<synchronous>, transform_indices = @transform_7, window_bounds = array<i64: 128, 128>}, {pipeline_mode = #tpu.pipeline_mode<synchronous>, transform_indices = @transform_8, window_bounds = array<i64: 1, 128>}, {transform_indices = @transform_9, window_bounds = array<i64: 8, 128>}]} {
    %c0 = arith.constant 0 : index
    %c0_0 = arith.constant 0 : index
    %0 = vector.load %arg1[%c0, %c0_0] : memref<8x128xbf16, #tpu.memory_space<vmem>>, vector<8x128xbf16>
    %c0_1 = arith.constant 0 : index
    %c0_2 = arith.constant 0 : index
    %1 = vector.load %arg3[%c0_1, %c0_2] : memref<128x128xbf16, #tpu.memory_space<vmem>>, vector<128x128xbf16>
    %cst = arith.constant dense<0.000000e+00> : vector<8x128xf32>
    %2 = tpu.matmul %0, %1, %cst {dimension_numbers = #tpu.dot_dimension_numbers<[1], [0], [0], [1], [0, 0, 1, 1], [], []>} : vector<8x128xbf16>, vector<128x128xbf16>, vector<8x128xf32> -> vector<8x128xf32>
    %c0_3 = arith.constant 0 : index
    %c0_4 = arith.constant 0 : index
    %3 = vector.load %arg6[%c0_3, %c0_4] : memref<1x128xf32, #tpu.memory_space<vmem>>, vector<1x128xf32>
    %4 = vector.broadcast %3 : vector<1x128xf32> to vector<8x128xf32>
    %5 = arith.addf %2, %4 : vector<8x128xf32>
    %c0_5 = arith.constant 0 : index
    %c0_6 = arith.constant 0 : index
    %6 = vector.load %arg4[%c0_5, %c0_6] : memref<128x128xbf16, #tpu.memory_space<vmem>>, vector<128x128xbf16>
    %cst_7 = arith.constant dense<0.000000e+00> : vector<8x128xf32>
    %7 = tpu.matmul %0, %6, %cst_7 {dimension_numbers = #tpu.dot_dimension_numbers<[1], [0], [0], [1], [0, 0, 1, 1], [], []>} : vector<8x128xbf16>, vector<128x128xbf16>, vector<8x128xf32> -> vector<8x128xf32>
    %c0_8 = arith.constant 0 : index
    %c0_9 = arith.constant 0 : index
    %8 = vector.load %arg7[%c0_8, %c0_9] : memref<1x128xf32, #tpu.memory_space<vmem>>, vector<1x128xf32>
    %9 = vector.broadcast %8 : vector<1x128xf32> to vector<8x128xf32>
    %10 = arith.addf %7, %9 : vector<8x128xf32>
    %11 = arith.mulf %5, %5 : vector<8x128xf32>
    %cst_10 = arith.constant dense<0.000000e+00> : vector<8xf32>
    %12 = vector.multi_reduction <add>, %11, %cst_10 [1] : vector<8x128xf32> to vector<8xf32>
    %13 = vector.shape_cast %12 : vector<8xf32> to vector<8x1xf32>
    %14 = math.rsqrt %13 : vector<8x1xf32>
    %15 = vector.broadcast %14 : vector<8x1xf32> to vector<8x128xf32>
    %16 = arith.mulf %5, %15 : vector<8x128xf32>
    %17 = arith.mulf %16, %10 : vector<8x128xf32>
    %18 = vector.shape_cast %17 : vector<8x128xf32> to vector<1x8x128xf32>
    %cst_11 = arith.constant dense<0.000000e+00> : vector<1x128xf32>
    %19 = vector.multi_reduction <add>, %18, %cst_11 [1] : vector<1x8x128xf32> to vector<1x128xf32>
    %20 = vector.shape_cast %19 : vector<1x128xf32> to vector<1x1x128xf32>
    %c0_12 = arith.constant 0 : index
    %c0_13 = arith.constant 0 : index
    %21 = vector.load %arg2[%c0_12, %c0_13] : memref<128x128xbf16, #tpu.memory_space<vmem>>, vector<128x128xbf16>
    %cst_14 = arith.constant dense<0.000000e+00> : vector<8x128xf32>
    %22 = tpu.matmul %0, %21, %cst_14 {dimension_numbers = #tpu.dot_dimension_numbers<[1], [0], [0], [1], [0, 0, 1, 1], [], []>} : vector<8x128xbf16>, vector<128x128xbf16>, vector<8x128xf32> -> vector<8x128xf32>
    %c0_15 = arith.constant 0 : index
    %c0_16 = arith.constant 0 : index
    %23 = vector.load %arg5[%c0_15, %c0_16] : memref<1x128xf32, #tpu.memory_space<vmem>>, vector<1x128xf32>
    %24 = vector.broadcast %23 : vector<1x128xf32> to vector<8x128xf32>
    %25 = arith.addf %22, %24 : vector<8x128xf32>
    %26 = arith.mulf %25, %25 : vector<8x128xf32>
    %cst_17 = arith.constant dense<0.000000e+00> : vector<8xf32>
    %27 = vector.multi_reduction <add>, %26, %cst_17 [1] : vector<8x128xf32> to vector<8xf32>
    %28 = vector.shape_cast %27 : vector<8xf32> to vector<8x1xf32>
    %29 = math.rsqrt %28 : vector<8x1xf32>
    %30 = vector.broadcast %29 : vector<8x1xf32> to vector<8x128xf32>
    %31 = arith.mulf %25, %30 : vector<8x128xf32>
    %32 = arith.truncf %20 : vector<1x1x128xf32> to vector<1x1x128xbf16>
    %33 = arith.truncf %31 : vector<8x128xf32> to vector<8x128xbf16>
    %34 = vector.shape_cast %33 : vector<8x128xbf16> to vector<1x8x128xbf16>
    %35 = vector.broadcast %32 : vector<1x1x128xbf16> to vector<1x8x128xbf16>
    %36 = arith.mulf %35, %34 : vector<1x8x128xbf16>
    %37 = vector.shape_cast %36 : vector<1x8x128xbf16> to vector<8x128xbf16>
    %c0_18 = arith.constant 0 : index
    %c0_19 = arith.constant 0 : index
    %38 = vector.load %arg8[%c0_18, %c0_19] : memref<128x128xbf16, #tpu.memory_space<vmem>>, vector<128x128xbf16>
    %cst_20 = arith.constant dense<0.000000e+00> : vector<8x128xf32>
    %39 = tpu.matmul %37, %38, %cst_20 {dimension_numbers = #tpu.dot_dimension_numbers<[1], [0], [0], [1], [0, 0, 1, 1], [], []>} : vector<8x128xbf16>, vector<128x128xbf16>, vector<8x128xf32> -> vector<8x128xf32>
    %c0_21 = arith.constant 0 : index
    %c0_22 = arith.constant 0 : index
    %40 = vector.load %arg9[%c0_21, %c0_22] : memref<1x128xf32, #tpu.memory_space<vmem>>, vector<1x128xf32>
    %41 = vector.broadcast %40 : vector<1x128xf32> to vector<8x128xf32>
    %42 = arith.addf %39, %41 : vector<8x128xf32>
    %c0_23 = arith.constant 0 : index
    %c0_24 = arith.constant 0 : index
    %43 = vector.load %arg10[%c0_23, %c0_24] : memref<8x128xf32, #tpu.memory_space<vmem>>, vector<8x128xf32>
    tpu.vector_store %arg10[%c0_23, %c0_24], %42 {strides = array<i32>} : memref<8x128xf32, #tpu.memory_space<vmem>>, vector<8x128xf32>,
    return
  }
  func.func @transform_0(%arg0: i32) -> (i32, i32) {
    %c0_i32 = arith.constant 0 : i32
    %c0_i32_0 = arith.constant 0 : i32
    return %arg0, %c0_i32 : i32, i32
  }
  func.func @transform_1(%arg0: i32) -> (i32, i32) {
    %c0_i32 = arith.constant 0 : i32
    %c0_i32_0 = arith.constant 0 : i32
    %c0_i32_1 = arith.constant 0 : i32
    return %c0_i32, %c0_i32_0 : i32, i32
  }
  func.func @transform_2(%arg0: i32) -> (i32, i32) {
    %c0_i32 = arith.constant 0 : i32
    %c0_i32_0 = arith.constant 0 : i32
    %c0_i32_1 = arith.constant 0 : i32
    return %c0_i32, %c0_i32_0 : i32, i32
  }
  func.func @transform_3(%arg0: i32) -> (i32, i32) {
    %c0_i32 = arith.constant 0 : i32
    %c0_i32_0 = arith.constant 0 : i32
    %c0_i32_1 = arith.constant 0 : i32
    return %c0_i32, %c0_i32_0 : i32, i32
  }
  func.func @transform_4(%arg0: i32) -> (i32, i32) {
    %c0_i32 = arith.constant 0 : i32
    %c0_i32_0 = arith.constant 0 : i32
    %c0_i32_1 = arith.constant 0 : i32
    return %c0_i32, %c0_i32_0 : i32, i32
  }
  func.func @transform_5(%arg0: i32) -> (i32, i32) {
    %c0_i32 = arith.constant 0 : i32
    %c0_i32_0 = arith.constant 0 : i32
    %c0_i32_1 = arith.constant 0 : i32
    return %c0_i32, %c0_i32_0 : i32, i32
  }
  func.func @transform_6(%arg0: i32) -> (i32, i32) {
    %c0_i32 = arith.constant 0 : i32
    %c0_i32_0 = arith.constant 0 : i32
    %c0_i32_1 = arith.constant 0 : i32
    return %c0_i32, %c0_i32_0 : i32, i32
  }
  func.func @transform_7(%arg0: i32) -> (i32, i32) {
    %c0_i32 = arith.constant 0 : i32
    %c0_i32_0 = arith.constant 0 : i32
    %c0_i32_1 = arith.constant 0 : i32
    return %c0_i32, %c0_i32_0 : i32, i32
  }
  func.func @transform_8(%arg0: i32) -> (i32, i32) {
    %c0_i32 = arith.constant 0 : i32
    %c0_i32_0 = arith.constant 0 : i32
    %c0_i32_1 = arith.constant 0 : i32
    return %c0_i32, %c0_i32_0 : i32, i32
  }
  func.func @transform_9(%arg0: i32) -> (i32, i32) {
    %c0_i32 = arith.constant 0 : i32
    %c0_i32_0 = arith.constant 0 : i32
    return %arg0, %c0_i32 : i32, i32
  }
}

module attributes {stable_mosaic.version = 11 : i64} {
  func.func @_hydra_kernel(%arg0: i32, %arg1: memref<8x128xbf16, #tpu.memory_space<vmem>>, %arg2: memref<128x128xbf16, #tpu.memory_space<vmem>>, %arg3: memref<128x128xbf16, #tpu.memory_space<vmem>>, %arg4: memref<128x128xbf16, #tpu.memory_space<vmem>>, %arg5: memref<1x128xf32, #tpu.memory_space<vmem>>, %arg6: memref<1x128xf32, #tpu.memory_space<vmem>>, %arg7: memref<1x128xf32, #tpu.memory_space<vmem>>, %arg8: memref<128x128xbf16, #tpu.memory_space<vmem>>, %arg9: memref<1x128xf32, #tpu.memory_space<vmem>>, %arg10: memref<8x128xf32, #tpu.memory_space<vmem>>) attributes {dimension_semantics = [#tpu.dimension_semantics<parallel>], iteration_bounds = array<i64: 2>, scalar_prefetch = 0 : i64, scratch_operands = 0 : i64, tpu.core_type = #tpu.core_type<tc>, window_params = [{transform_indices = @transform_0, window_bounds = array<i64: 8, 128>}, {pipeline_mode = #tpu.pipeline_mode<synchronous>, transform_indices = @transform_1, window_bounds = array<i64: 128, 128>}, {pipeline_mode = #tpu.pipeline_mode<synchronous>, transform_indices = @transform_2, window_bounds = array<i64: 128, 128>}, {pipeline_mode = #tpu.pipeline_mode<synchronous>, transform_indices = @transform_3, window_bounds = array<i64: 128, 128>}, {pipeline_mode = #tpu.pipeline_mode<synchronous>, transform_indices = @transform_4, window_bounds = array<i64: 1, 128>}, {pipeline_mode = #tpu.pipeline_mode<synchronous>, transform_indices = @transform_5, window_bounds = array<i64: 1, 128>}, {pipeline_mode = #tpu.pipeline_mode<synchronous>, transform_indices = @transform_6, window_bounds = array<i64: 1, 128>}, {pipeline_mode = #tpu.pipeline_mode<synchronous>, transform_indices = @transform_7, window_bounds = array<i64: 128, 128>}, {pipeline_mode = #tpu.pipeline_mode<synchronous>, transform_indices = @transform_8, window_bounds = array<i64: 1, 128>}, {transform_indices = @transform_9, window_bounds = array<i64: 8, 128>}]} {
    %c0 = arith.constant 0 : index
    %c0_0 = arith.constant 0 : index
    %0 = vector.load %arg1[%c0, %c0_0] : memref<8x128xbf16, #tpu.memory_space<vmem>>, vector<8x128xbf16>
    %c0_1 = arith.constant 0 : index
    %c0_2 = arith.constant 0 : index
    %1 = vector.load %arg3[%c0_1, %c0_2] : memref<128x128xbf16, #tpu.memory_space<vmem>>, vector<128x128xbf16>
    %cst = arith.constant dense<0.000000e+00> : vector<8x128xf32>
    %2 = tpu.matmul %0, %1, %cst {dimension_numbers = #tpu.dot_dimension_numbers<[1], [0], [0], [1], [0, 0, 1, 1], [], []>} : vector<8x128xbf16>, vector<128x128xbf16>, vector<8x128xf32> -> vector<8x128xf32>
    %c0_3 = arith.constant 0 : index
    %c0_4 = arith.constant 0 : index
    %3 = vector.load %arg6[%c0_3, %c0_4] : memref<1x128xf32, #tpu.memory_space<vmem>>, vector<1x128xf32>
    %4 = vector.broadcast %3 : vector<1x128xf32> to vector<8x128xf32>
    %5 = arith.addf %2, %4 : vector<8x128xf32>
    %c0_5 = arith.constant 0 : index
    %c0_6 = arith.constant 0 : index
    %6 = vector.load %arg4[%c0_5, %c0_6] : memref<128x128xbf16, #tpu.memory_space<vmem>>, vector<128x128xbf16>
    %cst_7 = arith.constant dense<0.000000e+00> : vector<8x128xf32>
    %7 = tpu.matmul %0, %6, %cst_7 {dimension_numbers = #tpu.dot_dimension_numbers<[1], [0], [0], [1], [0, 0, 1, 1], [], []>} : vector<8x128xbf16>, vector<128x128xbf16>, vector<8x128xf32> -> vector<8x128xf32>
    %c0_8 = arith.constant 0 : index
    %c0_9 = arith.constant 0 : index
    %8 = vector.load %arg7[%c0_8, %c0_9] : memref<1x128xf32, #tpu.memory_space<vmem>>, vector<1x128xf32>
    %9 = vector.broadcast %8 : vector<1x128xf32> to vector<8x128xf32>
    %10 = arith.addf %7, %9 : vector<8x128xf32>
    %11 = arith.mulf %5, %5 : vector<8x128xf32>
    %cst_10 = arith.constant dense<0.000000e+00> : vector<8xf32>
    %12 = vector.multi_reduction <add>, %11, %cst_10 [1] : vector<8x128xf32> to vector<8xf32>
    %13 = vector.shape_cast %12 : vector<8xf32> to vector<8x1xf32>
    %14 = math.rsqrt %13 : vector<8x1xf32>
    %15 = vector.broadcast %14 : vector<8x1xf32> to vector<8x128xf32>
    %16 = arith.mulf %5, %15 : vector<8x128xf32>
    %17 = arith.mulf %16, %10 : vector<8x128xf32>
    %18 = vector.shape_cast %17 : vector<8x128xf32> to vector<1x8x128xf32>
    %cst_11 = arith.constant dense<0.000000e+00> : vector<1x128xf32>
    %19 = vector.multi_reduction <add>, %18, %cst_11 [1] : vector<1x8x128xf32> to vector<1x128xf32>
    %20 = vector.shape_cast %19 : vector<1x128xf32> to vector<1x1x128xf32>
    %c0_12 = arith.constant 0 : index
    %c0_13 = arith.constant 0 : index
    %21 = vector.load %arg2[%c0_12, %c0_13] : memref<128x128xbf16, #tpu.memory_space<vmem>>, vector<128x128xbf16>
    %cst_14 = arith.constant dense<0.000000e+00> : vector<8x128xf32>
    %22 = tpu.matmul %0, %21, %cst_14 {dimension_numbers = #tpu.dot_dimension_numbers<[1], [0], [0], [1], [0, 0, 1, 1], [], []>} : vector<8x128xbf16>, vector<128x128xbf16>, vector<8x128xf32> -> vector<8x128xf32>
    %c0_15 = arith.constant 0 : index
    %c0_16 = arith.constant 0 : index
    %23 = vector.load %arg5[%c0_15, %c0_16] : memref<1x128xf32, #tpu.memory_space<vmem>>, vector<1x128xf32>
    %24 = vector.broadcast %23 : vector<1x128xf32> to vector<8x128xf32>
    %25 = arith.addf %22, %24 : vector<8x128xf32>
    %26 = arith.mulf %25, %25 : vector<8x128xf32>
    %cst_17 = arith.constant dense<0.000000e+00> : vector<8xf32>
    %27 = vector.multi_reduction <add>, %26, %cst_17 [1] : vector<8x128xf32> to vector<8xf32>
    %28 = vector.shape_cast %27 : vector<8xf32> to vector<8x1xf32>
    %29 = math.rsqrt %28 : vector<8x1xf32>
    %30 = vector.broadcast %29 : vector<8x1xf32> to vector<8x128xf32>
    %31 = arith.mulf %25, %30 : vector<8x128xf32>
    %32 = arith.truncf %20 : vector<1x1x128xf32> to vector<1x1x128xbf16>
    %33 = arith.truncf %31 : vector<8x128xf32> to vector<8x128xbf16>
    %34 = vector.shape_cast %33 : vector<8x128xbf16> to vector<1x8x128xbf16>
    %35 = vector.broadcast %32 : vector<1x1x128xbf16> to vector<1x8x128xbf16>
    %36 = arith.mulf %35, %34 : vector<1x8x128xbf16>
    %37 = vector.shape_cast %36 : vector<1x8x128xbf16> to vector<8x128xbf16>
    %c0_18 = arith.constant 0 : index
    %c0_19 = arith.constant 0 : index
    %38 = vector.load %arg8[%c0_18, %c0_19] : memref<128x128xbf16, #tpu.memory_space<vmem>>, vector<128x128xbf16>
    %cst_20 = arith.constant dense<0.000000e+00> : vector<8x128xf32>
    %39 = tpu.matmul %37, %38, %cst_20 {dimension_numbers = #tpu.dot_dimension_numbers<[1], [0], [0], [1], [0, 0, 1, 1], [], []>} : vector<8x128xbf16>, vector<128x128xbf16>, vector<8x128xf32> -> vector<8x128xf32>
    %c0_21 = arith.constant 0 : index
    %c0_22 = arith.constant 0 : index
    %40 = vector.load %arg9[%c0_21, %c0_22] : memref<1x128xf32, #tpu.memory_space<vmem>>, vector<1x128xf32>
    %41 = vector.broadcast %40 : vector<1x128xf32> to vector<8x128xf32>
    %42 = arith.addf %39, %41 : vector<8x128xf32>
    %c0_23 = arith.constant 0 : index
    %c0_24 = arith.constant 0 : index
    %43 = vector.load %arg10[%c0_23, %c0_24] : memref<8x128xf32, #tpu.memory_space<vmem>>, vector<8x128xf32>
    tpu.vector_store %arg10[%c0_23, %c0_24], %42 {strides = array<i32>} : memref<8x128xf32, #tpu.memory_space<vmem>>, vector<8x128xf32>,
    return
  }
  func.func @transform_0(%arg0: i32) -> (i32, i32) {
    %c0_i32 = arith.constant 0 : i32
    %c0_i32_0 = arith.constant 0 : i32
    return %arg0, %c0_i32 : i32, i32
  }
  func.func @transform_1(%arg0: i32) -> (i32, i32) {
    %c0_i32 = arith.constant 0 : i32
    %c0_i32_0 = arith.constant 0 : i32
    %c0_i32_1 = arith.constant 0 : i32
    return %c0_i32, %c0_i32_0 : i32, i32
  }
  func.func @transform_2(%arg0: i32) -> (i32, i32) {
    %c0_i32 = arith.constant 0 : i32
    %c0_i32_0 = arith.constant 0 : i32
    %c0_i32_1 = arith.constant 0 : i32
    return %c0_i32, %c0_i32_0 : i32, i32
  }
  func.func @transform_3(%arg0: i32) -> (i32, i32) {
    %c0_i32 = arith.constant 0 : i32
    %c0_i32_0 = arith.constant 0 : i32
    %c0_i32_1 = arith.constant 0 : i32
    return %c0_i32, %c0_i32_0 : i32, i32
  }
  func.func @transform_4(%arg0: i32) -> (i32, i32) {
    %c0_i32 = arith.constant 0 : i32
    %c0_i32_0 = arith.constant 0 : i32
    %c0_i32_1 = arith.constant 0 : i32
    return %c0_i32, %c0_i32_0 : i32, i32
  }
  func.func @transform_5(%arg0: i32) -> (i32, i32) {
    %c0_i32 = arith.constant 0 : i32
    %c0_i32_0 = arith.constant 0 : i32
    %c0_i32_1 = arith.constant 0 : i32
    return %c0_i32, %c0_i32_0 : i32, i32
  }
  func.func @transform_6(%arg0: i32) -> (i32, i32) {
    %c0_i32 = arith.constant 0 : i32
    %c0_i32_0 = arith.constant 0 : i32
    %c0_i32_1 = arith.constant 0 : i32
    return %c0_i32, %c0_i32_0 : i32, i32
  }
  func.func @transform_7(%arg0: i32) -> (i32, i32) {
    %c0_i32 = arith.constant 0 : i32
    %c0_i32_0 = arith.constant 0 : i32
    %c0_i32_1 = arith.constant 0 : i32
    return %c0_i32, %c0_i32_0 : i32, i32
  }
  func.func @transform_8(%arg0: i32) -> (i32, i32) {
    %c0_i32 = arith.constant 0 : i32
    %c0_i32_0 = arith.constant 0 : i32
    %c0_i32_1 = arith.constant 0 : i32
    return %c0_i32, %c0_i32_0 : i32, i32
  }
  func.func @transform_9(%arg0: i32) -> (i32, i32) {
    %c0_i32 = arith.constant 0 : i32
    %c0_i32_0 = arith.constant 0 : i32
    return %arg0, %c0_i32 : i32, i32
  }
}

</mosaic_0001>

<llo_original>
// kernel: tpu_custom_call.1
$region0: #{tpu_custom_call.1}
  #allocation0 [shape = 'u32[]', space=smem, size = 0x4, offset = 0x4, fixed_abs, tag = 'smem constant byte address 0x4 - core index']
  #allocation1 [shape = 'u32[144,128]{1,0:T(1,128)}', space=vmem, size = 0x12000, scoped, tag = 'internal scratch']
  %s0 = inlined_call_operand.hbm [shape: bf16[16,128], index: 0, kind: input, shape index: {}]
  %s1 = inlined_call_operand.hbm [shape: bf16[128,128], index: 1, kind: input, shape index: {}]
  %s2 = inlined_call_operand.hbm [shape: bf16[128,128], index: 2, kind: input, shape index: {}]
  %s3 = inlined_call_operand.hbm [shape: bf16[128,128], index: 3, kind: input, shape index: {}]
  %s4 = inlined_call_operand.vmem [shape: f32[1,128], index: 4, kind: input, shape index: {}]
  %s5 = inlined_call_operand.vmem [shape: f32[1,128], index: 5, kind: input, shape index: {}]
  %s6 = inlined_call_operand.vmem [shape: f32[1,128], index: 6, kind: input, shape index: {}]
  %s7 = inlined_call_operand.hbm [shape: bf16[128,128], index: 7, kind: input, shape index: {}]
  %s8 = inlined_call_operand.vmem [shape: f32[1,128], index: 8, kind: input, shape index: {}]
  %s9 = inlined_call_operand.hbm [shape: f32[16,128], index: 9, kind: output, shape index: {}]
  %s10 = sld [smem:[#allocation0]]
  $region89: #{tpu_custom_call.1} parent=0
    _
  %s12 = ssub.s32 1, %s10
  %s13 = scalar_select 0, %s12, %s10
  $region1: #{tpu_custom_call.1} parent=0
    #allocation2 [shape = 'u8[4096]{0}', space=vmem, size = 0x1000, scoped, tag = 'input window, operand 0']
    #allocation3 [shape = 's32[2]{0}', space=sflag, size = 0x8, scoped, tag = 'scoped memory for tpu_custom_call.1']
    #allocation4 [shape = 's32[2]{0}', space=sflag, size = 0x8, scoped, tag = 'scoped memory for tpu_custom_call.1']
    #allocation5 [shape = 'u8[32768]{0}', space=vmem, size = 0x8000, scoped, tag = 'input window, operand 1, single buffered']
    #allocation6 [shape = 's32[1]{0}', space=sflag, size = 0x4, scoped, tag = 'scoped memory for tpu_custom_call.1']
    #allocation7 [shape = 'u8[32768]{0}', space=vmem, size = 0x8000, scoped, tag = 'input window, operand 2, single buffered']
    #allocation8 [shape = 'u8[32768]{0}', space=vmem, size = 0x8000, scoped, tag = 'input window, operand 3, single buffered']
    #allocation9 [shape = 's32[1]{0}', space=sflag, size = 0x4, scoped, tag = 'scoped memory for tpu_custom_call.1']
    #allocation10 [shape = 'u8[32768]{0}', space=vmem, size = 0x8000, scoped, tag = 'input window, operand 7, single buffered']
    #allocation11 [shape = 'u8[8192]{0}', space=vmem, size = 0x2000, scoped, tag = 'output window, operand 0']
    %14 = vsyncpa [#allocation3], 0
    %s15 = scalar_lea.sflag [#allocation3], 1
    %16 = vsyncpa %s15, 0
    %17 = vsyncpa [#allocation6], 0
    %18 = vsyncpa [#allocation9], 0
    %19 = vsyncpa [#allocation4], 0
    %s20 = scalar_lea.sflag [#allocation4], 1
    %21 = vsyncpa %s20, 0
    loop: start=0, step=1, limit=4
    $region2: #{tpu_custom_call.1} parent=1 // loop_pre_header
      _
    $region3: #{tpu_custom_call.1} parent=1 // loop_header
      %s23 = sphi 0, %s27
      %p24 = scmp.ge.s32.totalorder %s23, 4
      %s33 = sphi 0, %s35
      %s36 = sphi 0, %s33
      %s37 = sphi 0, %s36
      %s53 = sphi 0, %s37
      %s57 = sphi 0, %s57
      %s59 = sphi 0, %s57
      %s60 = sphi 0, %s59
      %s74 = sphi 0, %s60
      %s78 = sphi 0, %s78
      %s80 = sphi 0, %s78
      %s81 = sphi 0, %s80
      %s95 = sphi 0, %s81
      %s99 = sphi 0, %s99
      %s101 = sphi 0, %s99
      %s102 = sphi 0, %s101
      %s116 = sphi 0, %s102
      %s120 = sphi 0, %s120
      %s122 = sphi 0, %s120
      %s123 = sphi 0, %s122
      %s137 = sphi 0, %s123
      %s141 = sphi 0, %s141
      %s143 = sphi 0, %s141
      %s144 = sphi 0, %s143
      %s158 = sphi 0, %s144
      %s162 = sphi 0, %s162
      %s164 = sphi 0, %s162
      %s165 = sphi 0, %s164
      %s179 = sphi 0, %s165
      %s183 = sphi 0, %s183
      %s185 = sphi 0, %s183
      %s186 = sphi 0, %s185
      %s200 = sphi 0, %s186
      %s204 = sphi 0, %s204
      %s206 = sphi 0, %s204
      %s207 = sphi 0, %s206
      %s221 = sphi 0, %s207
      %s227 = sphi 0, %s229
      %s230 = sphi 0, %s227
      %s231 = sphi 0, %s230
      %s247 = sphi 0, %s231
    $region4: #{tpu_custom_call.1} parent=1 // loop_header_branch
      %26 = sbr.rel (%p24) target = $region8
    $region5: #{tpu_custom_call.1} parent=1 // loop_body
      %s28 = ssub.s32 %s23, 1
      %s29 = ssub.s32 %s23, 2
      %s30 = sadd.s32 %s23, 1
      %s31 = ssub.s32 %s23, %s30
      %p32 = scmp.eq.s32.totalorder %s31, 0
      %s34 = sadd.s32 %s33, 1
      %s35 = scalar_select %p32, %s33, %s34
      %p38 = pneg %p32
      %p39 = scmp.eq.s32.totalorder %s23, 1
      %p40 = por %p38, %p39
      %p41 = scmp.ne.s32.totalorder %s33, %s36
      %p42 = scmp.eq.s32.totalorder %s23, 0
      %p43 = por %p41, %p42
      %p44 = scmp.ne.s32.totalorder %s33, %s36
      %p45 = scmp.eq.s32.totalorder %s28, 1
      %p46 = por %p44, %p45
      %p47 = scmp.ne.s32.totalorder %s36, %s37
      %p48 = scmp.eq.s32.totalorder %s28, 0
      %p49 = por %p47, %p48
      %p50 = scmp.ne.s32.totalorder %s36, %s37
      %p51 = scmp.eq.s32.totalorder %s29, 1
      %p52 = por %p50, %p51
      %p54 = scmp.ne.s32.totalorder %s37, %s53
      %p55 = scmp.eq.s32.totalorder %s29, 0
      %p56 = por %p54, %p55
      %s58 = sadd.s32 %s57, 1
      %p61 = scmp.eq.s32.totalorder %s23, 1
      %p62 = scmp.ne.s32.totalorder %s57, %s59
      %p63 = scmp.eq.s32.totalorder %s23, 0
      %p64 = por %p62, %p63
      %p65 = scmp.ne.s32.totalorder %s57, %s59
      %p66 = scmp.eq.s32.totalorder %s28, 1
      %p67 = por %p65, %p66
      %p68 = scmp.ne.s32.totalorder %s59, %s60
      %p69 = scmp.eq.s32.totalorder %s28, 0
      %p70 = por %p68, %p69
      %p71 = scmp.ne.s32.totalorder %s59, %s60
      %p72 = scmp.eq.s32.totalorder %s29, 1
      %p73 = por %p71, %p72
      %p75 = scmp.ne.s32.totalorder %s60, %s74
      %p76 = scmp.eq.s32.totalorder %s29, 0
      %p77 = por %p75, %p76
      %s79 = sadd.s32 %s78, 1
      %p82 = scmp.eq.s32.totalorder %s23, 1
      %p83 = scmp.ne.s32.totalorder %s78, %s80
      %p84 = scmp.eq.s32.totalorder %s23, 0
      %p85 = por %p83, %p84
      %p86 = scmp.ne.s32.totalorder %s78, %s80
      %p87 = scmp.eq.s32.totalorder %s28, 1
      %p88 = por %p86, %p87
      %p89 = scmp.ne.s32.totalorder %s80, %s81
      %p90 = scmp.eq.s32.totalorder %s28, 0
      %p91 = por %p89, %p90
      %p92 = scmp.ne.s32.totalorder %s80, %s81
      %p93 = scmp.eq.s32.totalorder %s29, 1
      %p94 = por %p92, %p93
      %p96 = scmp.ne.s32.totalorder %s81, %s95
      %p97 = scmp.eq.s32.totalorder %s29, 0
      %p98 = por %p96, %p97
      %s100 = sadd.s32 %s99, 1
      %p103 = scmp.eq.s32.totalorder %s23, 1
      %p104 = scmp.ne.s32.totalorder %s99, %s101
      %p105 = scmp.eq.s32.totalorder %s23, 0
      %p106 = por %p104, %p105
      %p107 = scmp.ne.s32.totalorder %s99, %s101
      %p108 = scmp.eq.s32.totalorder %s28, 1
      %p109 = por %p107, %p108
      %p110 = scmp.ne.s32.totalorder %s101, %s102
      %p111 = scmp.eq.s32.totalorder %s28, 0
      %p112 = por %p110, %p111
      %p113 = scmp.ne.s32.totalorder %s101, %s102
      %p114 = scmp.eq.s32.totalorder %s29, 1
      %p115 = por %p113, %p114
      %p117 = scmp.ne.s32.totalorder %s102, %s116
      %p118 = scmp.eq.s32.totalorder %s29, 0
      %p119 = por %p117, %p118
      %s121 = sadd.s32 %s120, 1
      %p124 = scmp.eq.s32.totalorder %s23, 1
      %p125 = scmp.ne.s32.totalorder %s120, %s122
      %p126 = scmp.eq.s32.totalorder %s23, 0
      %p127 = por %p125, %p126
      %p128 = scmp.ne.s32.totalorder %s120, %s122
      %p129 = scmp.eq.s32.totalorder %s28, 1
      %p130 = por %p128, %p129
      %p131 = scmp.ne.s32.totalorder %s122, %s123
      %p132 = scmp.eq.s32.totalorder %s28, 0
      %p133 = por %p131, %p132
      %p134 = scmp.ne.s32.totalorder %s122, %s123
      %p135 = scmp.eq.s32.totalorder %s29, 1
      %p136 = por %p134, %p135
      %p138 = scmp.ne.s32.totalorder %s123, %s137
      %p139 = scmp.eq.s32.totalorder %s29, 0
      %p140 = por %p138, %p139
      %s142 = sadd.s32 %s141, 1
      %p145 = scmp.eq.s32.totalorder %s23, 1
      %p146 = scmp.ne.s32.totalorder %s141, %s143
      %p147 = scmp.eq.s32.totalorder %s23, 0
      %p148 = por %p146, %p147
      %p149 = scmp.ne.s32.totalorder %s141, %s143
      %p150 = scmp.eq.s32.totalorder %s28, 1
      %p151 = por %p149, %p150
      %p152 = scmp.ne.s32.totalorder %s143, %s144
      %p153 = scmp.eq.s32.totalorder %s28, 0
      %p154 = por %p152, %p153
      %p155 = scmp.ne.s32.totalorder %s143, %s144
      %p156 = scmp.eq.s32.totalorder %s29, 1
      %p157 = por %p155, %p156
      %p159 = scmp.ne.s32.totalorder %s144, %s158
      %p160 = scmp.eq.s32.totalorder %s29, 0
      %p161 = por %p159, %p160
      %s163 = sadd.s32 %s162, 1
      %p166 = scmp.eq.s32.totalorder %s23, 1
      %p167 = scmp.ne.s32.totalorder %s162, %s164
      %p168 = scmp.eq.s32.totalorder %s23, 0
      %p169 = por %p167, %p168
      %p170 = scmp.ne.s32.totalorder %s162, %s164
      %p171 = scmp.eq.s32.totalorder %s28, 1
      %p172 = por %p170, %p171
      %p173 = scmp.ne.s32.totalorder %s164, %s165
      %p174 = scmp.eq.s32.totalorder %s28, 0
      %p175 = por %p173, %p174
      %p176 = scmp.ne.s32.totalorder %s164, %s165
      %p177 = scmp.eq.s32.totalorder %s29, 1
      %p178 = por %p176, %p177
      %p180 = scmp.ne.s32.totalorder %s165, %s179
      %p181 = scmp.eq.s32.totalorder %s29, 0
      %p182 = por %p180, %p181
      %s184 = sadd.s32 %s183, 1
      %p187 = scmp.eq.s32.totalorder %s23, 1
      %p188 = scmp.ne.s32.totalorder %s183, %s185
      %p189 = scmp.eq.s32.totalorder %s23, 0
      %p190 = por %p188, %p189
      %p191 = scmp.ne.s32.totalorder %s183, %s185
      %p192 = scmp.eq.s32.totalorder %s28, 1
      %p193 = por %p191, %p192
      %p194 = scmp.ne.s32.totalorder %s185, %s186
      %p195 = scmp.eq.s32.totalorder %s28, 0
      %p196 = por %p194, %p195
      %p197 = scmp.ne.s32.totalorder %s185, %s186
      %p198 = scmp.eq.s32.totalorder %s29, 1
      %p199 = por %p197, %p198
      %p201 = scmp.ne.s32.totalorder %s186, %s200
      %p202 = scmp.eq.s32.totalorder %s29, 0
      %p203 = por %p201, %p202
      %s205 = sadd.s32 %s204, 1
      %p208 = scmp.eq.s32.totalorder %s23, 1
      %p209 = scmp.ne.s32.totalorder %s204, %s206
      %p210 = scmp.eq.s32.totalorder %s23, 0
      %p211 = por %p209, %p210
      %p212 = scmp.ne.s32.totalorder %s204, %s206
      %p213 = scmp.eq.s32.totalorder %s28, 1
      %p214 = por %p212, %p213
      %p215 = scmp.ne.s32.totalorder %s206, %s207
      %p216 = scmp.eq.s32.totalorder %s28, 0
      %p217 = por %p215, %p216
      %p218 = scmp.ne.s32.totalorder %s206, %s207
      %p219 = scmp.eq.s32.totalorder %s29, 1
      %p220 = por %p218, %p219
      %p222 = scmp.ne.s32.totalorder %s207, %s221
      %p223 = scmp.eq.s32.totalorder %s29, 0
      %p224 = por %p222, %p223
      %s225 = ssub.s32 %s23, %s30
      %p226 = scmp.eq.s32.totalorder %s225, 0
      %s228 = sadd.s32 %s227, 1
      %s229 = scalar_select %p226, %s227, %s228
      %p232 = pneg %p226
      %p233 = scmp.eq.s32.totalorder %s23, 1
      %p234 = por %p232, %p233
      %p235 = scmp.ne.s32.totalorder %s227, %s230
      %p236 = scmp.eq.s32.totalorder %s23, 0
      %p237 = por %p235, %p236
      %p238 = scmp.ne.s32.totalorder %s227, %s230
      %p239 = scmp.eq.s32.totalorder %s28, 1
      %p240 = por %p238, %p239
      %p241 = scmp.ne.s32.totalorder %s230, %s231
      %p242 = scmp.eq.s32.totalorder %s28, 0
      %p243 = por %p241, %p242
      %p244 = scmp.ne.s32.totalorder %s230, %s231
      %p245 = scmp.eq.s32.totalorder %s29, 1
      %p246 = por %p244, %p245
      %p248 = scmp.ne.s32.totalorder %s231, %s247
      %p249 = scmp.eq.s32.totalorder %s29, 0
      %p250 = por %p248, %p249
      %p251 = scmp.le.s32.totalorder 1, %s23
      %p252 = scmp.lt.s32.totalorder %s23, 3
      %p253 = pnand %p251, %p252
      %p254 = pneg %p253
      // Predicated region
      $region9: #{tpu_custom_call.1} parent=5 // pred_check
        _
      $region10: #{tpu_custom_call.1} parent=5 // pred_check_branch
        %256 = sbr.rel (%p253) target = $region12
      $region11: #{tpu_custom_call.1} parent=5 // pred_region
        %s257 = ssub.s32 %s23, 1
        // Predicated region
        $region13: #{tpu_custom_call.1} parent=11 // pred_check
          %p258 = pneg %p70
        $region14: #{tpu_custom_call.1} parent=11 // pred_check_branch
          %260 = sbr.rel (%p258) target = $region16
        $region15: #{tpu_custom_call.1} parent=11 // pred_region
          %s262 = ssub.s32 1024, 1024
          %263 = vsyncadd [#allocation6], %s262
          %s264 = sshll.u32 [#allocation5], 4
          %s265 = int_to_ptr.vmem [resolvable:$true] %s264
          %270 = dma.hbm_to_vmem [thread:$0]  %s1, 1024, %s265, [#allocation6], 64, 64, 4
        $region16: #{tpu_custom_call.1} parent=11 // pred_fallthru
          _
        // Predicated region
        $region17: #{tpu_custom_call.1} parent=11 // pred_check
          %p271 = pneg %p91
        $region18: #{tpu_custom_call.1} parent=11 // pred_check_branch
          %273 = sbr.rel (%p271) target = $region20
        $region19: #{tpu_custom_call.1} parent=11 // pred_region
          %s275 = ssub.s32 1024, 1024
          %276 = vsyncadd [#allocation6], %s275
          %s277 = sshll.u32 [#allocation7], 4
          %s278 = int_to_ptr.vmem [resolvable:$true] %s277
          %283 = dma.hbm_to_vmem [thread:$0]  %s2, 1024, %s278, [#allocation6], 64, 64, 4
        $region20: #{tpu_custom_call.1} parent=11 // pred_fallthru
          _
        // Predicated region
        $region21: #{tpu_custom_call.1} parent=11 // pred_check
          %p284 = pneg %p112
        $region22: #{tpu_custom_call.1} parent=11 // pred_check_branch
          %286 = sbr.rel (%p284) target = $region24
        $region23: #{tpu_custom_call.1} parent=11 // pred_region
          %s288 = ssub.s32 1024, 1024
          %289 = vsyncadd [#allocation9], %s288
          %s290 = sshll.u32 [#allocation8], 4
          %s291 = int_to_ptr.vmem [resolvable:$true] %s290
          %296 = dma.hbm_to_vmem [thread:$0]  %s3, 1024, %s291, [#allocation9], 64, 64, 4
        $region24: #{tpu_custom_call.1} parent=11 // pred_fallthru
          _
        // Predicated region
        $region25: #{tpu_custom_call.1} parent=11 // pred_check
          %p297 = pneg %p133
        $region26: #{tpu_custom_call.1} parent=11 // pred_check_branch
          %299 = sbr.rel (%p297) target = $region28
        $region27: #{tpu_custom_call.1} parent=11 // pred_region
          _
        $region28: #{tpu_custom_call.1} parent=11 // pred_fallthru
          _
        // Predicated region
        $region29: #{tpu_custom_call.1} parent=11 // pred_check
          %p300 = pneg %p154
        $region30: #{tpu_custom_call.1} parent=11 // pred_check_branch
          %302 = sbr.rel (%p300) target = $region32
        $region31: #{tpu_custom_call.1} parent=11 // pred_region
          _
        $region32: #{tpu_custom_call.1} parent=11 // pred_fallthru
          _
        // Predicated region
        $region33: #{tpu_custom_call.1} parent=11 // pred_check
          %p303 = pneg %p175
        $region34: #{tpu_custom_call.1} parent=11 // pred_check_branch
          %305 = sbr.rel (%p303) target = $region36
        $region35: #{tpu_custom_call.1} parent=11 // pred_region
          _
        $region36: #{tpu_custom_call.1} parent=11 // pred_fallthru
          _
        // Predicated region
        $region37: #{tpu_custom_call.1} parent=11 // pred_check
          %p306 = pneg %p196
        $region38: #{tpu_custom_call.1} parent=11 // pred_check_branch
          %308 = sbr.rel (%p306) target = $region40
        $region39: #{tpu_custom_call.1} parent=11 // pred_region
          %s310 = ssub.s32 1024, 1024
          %311 = vsyncadd [#allocation9], %s310
          %s312 = sshll.u32 [#allocation10], 4
          %s313 = int_to_ptr.vmem [resolvable:$true] %s312
          %318 = dma.hbm_to_vmem [thread:$0]  %s7, 1024, %s313, [#allocation9], 64, 64, 4
        $region40: #{tpu_custom_call.1} parent=11 // pred_fallthru
          _
        // Predicated region
        $region41: #{tpu_custom_call.1} parent=11 // pred_check
          %p319 = pneg %p217
        $region42: #{tpu_custom_call.1} parent=11 // pred_check_branch
          %321 = sbr.rel (%p319) target = $region44
        $region43: #{tpu_custom_call.1} parent=11 // pred_region
          _
        $region44: #{tpu_custom_call.1} parent=11 // pred_fallthru
          _
      $region12: #{tpu_custom_call.1} parent=5 // pred_fallthru
        _
      %p322 = scmp.lt.s32.totalorder %s23, 2
      // Predicated region
      $region45: #{tpu_custom_call.1} parent=5 // pred_check
        %p323 = pneg %p322
      $region46: #{tpu_custom_call.1} parent=5 // pred_check_branch
        %325 = sbr.rel (%p323) target = $region48
      $region47: #{tpu_custom_call.1} parent=5 // pred_region
        // Predicated region
        $region49: #{tpu_custom_call.1} parent=47 // pred_check
          %p326 = pneg %p43
        $region50: #{tpu_custom_call.1} parent=47 // pred_check_branch
          %328 = sbr.rel (%p326) target = $region52
        $region51: #{tpu_custom_call.1} parent=47 // pred_region
          %s329 = sand.u32 %s33, 1
          %s330 = scalar_lea.sflag [#allocation3], %s329
          %s331 = sand.u32 %s33, 1
          %s332 = smul.addr %s331, 4
          %s333 = scalar_lea.vmem [#allocation2], %s332
          %s335 = ssub.s32 64, 64
          %336 = vsyncadd %s330, %s335
          %s337 = smul.addr %s23, 64
          %s338 = scalar_lea.hbm %s0, %s337
          %s340 = sshll.u32 %s333, 4
          %s341 = int_to_ptr.vmem [resolvable:$true] %s340
          %343 = dma.hbm_to_vmem [thread:$0]  %s338, 64, %s341, %s330
        $region52: #{tpu_custom_call.1} parent=47 // pred_fallthru
          _
      $region48: #{tpu_custom_call.1} parent=5 // pred_fallthru
        _
      %p344 = scmp.le.s32.totalorder 1, %s23
      %p345 = scmp.lt.s32.totalorder %s23, 3
      %p346 = pnand %p344, %p345
      %p347 = pneg %p346
      // Predicated region
      $region53: #{tpu_custom_call.1} parent=5 // pred_check
        _
      $region54: #{tpu_custom_call.1} parent=5 // pred_check_branch
        %349 = sbr.rel (%p346) target = $region56
      $region55: #{tpu_custom_call.1} parent=5 // pred_region
        %s350 = ssub.s32 %s23, 1
        %s351 = sand.u32 %s36, 1
        %s352 = scalar_lea.sflag [#allocation3], %s351
        %s353 = sand.u32 %s36, 1
        %s354 = smul.addr %s353, 4
        %s355 = scalar_lea.vmem [#allocation2], %s354
        // Predicated region
        $region57: #{tpu_custom_call.1} parent=55 // pred_check
          %p356 = pneg %p49
        $region58: #{tpu_custom_call.1} parent=55 // pred_check_branch
          %358 = sbr.rel (%p356) target = $region60
        $region59: #{tpu_custom_call.1} parent=55 // pred_region
          %359 = dma.done %s352, 64
        $region60: #{tpu_custom_call.1} parent=55 // pred_fallthru
          _
        // Predicated region
        $region61: #{tpu_custom_call.1} parent=55 // pred_check
          %p360 = pneg %p70
        $region62: #{tpu_custom_call.1} parent=55 // pred_check_branch
          %362 = sbr.rel (%p360) target = $region64
        $region63: #{tpu_custom_call.1} parent=55 // pred_region
          %363 = dma.done [#allocation6], 1024
        $region64: #{tpu_custom_call.1} parent=55 // pred_fallthru
          _
        // Predicated region
        $region65: #{tpu_custom_call.1} parent=55 // pred_check
          %p364 = pneg %p91
        $region66: #{tpu_custom_call.1} parent=55 // pred_check_branch
          %366 = sbr.rel (%p364) target = $region68
        $region67: #{tpu_custom_call.1} parent=55 // pred_region
          %367 = dma.done [#allocation6], 1024
        $region68: #{tpu_custom_call.1} parent=55 // pred_fallthru
          _
        // Predicated region
        $region69: #{tpu_custom_call.1} parent=55 // pred_check
          %p368 = pneg %p112
        $region70: #{tpu_custom_call.1} parent=55 // pred_check_branch
          %370 = sbr.rel (%p368) target = $region72
        $region71: #{tpu_custom_call.1} parent=55 // pred_region
          %371 = dma.done [#allocation9], 1024
        $region72: #{tpu_custom_call.1} parent=55 // pred_fallthru
          _
        // Predicated region
        $region73: #{tpu_custom_call.1} parent=55 // pred_check
          %p372 = pneg %p196
        $region74: #{tpu_custom_call.1} parent=55 // pred_check_branch
          %374 = sbr.rel (%p372) target = $region76
        $region75: #{tpu_custom_call.1} parent=55 // pred_region
          %375 = dma.done [#allocation9], 1024
        $region76: #{tpu_custom_call.1} parent=55 // pred_fallthru
          _
        %s376 = sand.u32 %s36, 1
        %s377 = scalar_lea.sflag [#allocation3], %s376
        %s378 = sand.u32 %s36, 1
        %s379 = smul.addr %s378, 4
        %s380 = scalar_lea.vmem [#allocation2], %s379
        %p381 = pneg %p49
        %p382 = pneg %p46
        %p383 = pneg %p70
        %p384 = pneg %p67
        %p385 = pneg %p91
        %p386 = pneg %p88
        %p387 = pneg %p112
        %p388 = pneg %p109
        %p389 = pneg %p133
        %p390 = pneg %p130
        %p391 = pneg %p154
        %p392 = pneg %p151
        %p393 = pneg %p175
        %p394 = pneg %p172
        %p395 = pneg %p196
        %p396 = pneg %p193
        %p397 = pneg %p217
        %p398 = pneg %p214
        %p399 = pneg %p243
        %p400 = pneg %p240
        %s401 = sand.u32 %s230, 1
        %s402 = scalar_lea.sflag [#allocation4], %s401
        %s403 = sand.u32 %s230, 1
        %s404 = smul.addr %s403, 8
        %s405 = scalar_lea.vmem [#allocation11], %s404
        %v407 = vld [vmem:[%s355] sm:$0xf]
        %v408 = vld [vmem:[#allocation7] sm:$0xf]
        %v409 = vld [vmem:[#allocation7 + $0x4] sm:$0xf]
        %v410 = vld [vmem:[#allocation7 + $0x8] sm:$0xf]
        %v411 = vld [vmem:[#allocation7 + $0xc] sm:$0xf]
        %v412 = vld [vmem:[#allocation7 + $0x10] sm:$0xf]
        %v413 = vld [vmem:[#allocation7 + $0x14] sm:$0xf]
        %v414 = vld [vmem:[#allocation7 + $0x18] sm:$0xf]
        %v415 = vld [vmem:[#allocation7 + $0x1c] sm:$0xf]
        %v416 = vld [vmem:[#allocation7 + $0x20] sm:$0xf]
        %v417 = vld [vmem:[#allocation7 + $0x24] sm:$0xf]
        %v418 = vld [vmem:[#allocation7 + $0x28] sm:$0xf]
        %v419 = vld [vmem:[#allocation7 + $0x2c] sm:$0xf]
        %v420 = vld [vmem:[#allocation7 + $0x30] sm:$0xf]
        %v421 = vld [vmem:[#allocation7 + $0x34] sm:$0xf]
        %v422 = vld [vmem:[#allocation7 + $0x38] sm:$0xf]
        %v423 = vld [vmem:[#allocation7 + $0x3c] sm:$0xf]
        %v424 = vld [vmem:[%s5] sm:$0x1]
        %v426 = vlaneseq
        %v427 = vshrl.u32 %v426, 7
        %v428 = vsub.s32 0, %v427
        %v429 = vrot.slane %v424, %v428
        %v447 = vunpack.c.l.b16 %v408
        %v448 = vunpack.c.l.b16 %v409
        %v449 = vunpack.c.l.b16 %v410
        %v450 = vunpack.c.l.b16 %v411
        %v451 = vunpack.c.l.b16 %v412
        %v452 = vunpack.c.l.b16 %v413
        %v453 = vunpack.c.l.b16 %v414
        %v454 = vunpack.c.l.b16 %v415
        %v455 = vunpack.c.l.b16 %v416
        %v456 = vunpack.c.l.b16 %v417
        %v457 = vunpack.c.l.b16 %v418
        %v458 = vunpack.c.l.b16 %v419
        %v459 = vunpack.c.l.b16 %v420
        %v460 = vunpack.c.l.b16 %v421
        %v461 = vunpack.c.l.b16 %v422
        %v462 = vunpack.c.l.b16 %v423
        %v463 = vpack.c.b16 %v448, %v447
        %v464 = vpack.c.b16 %v450, %v449
        %v465 = vpack.c.b16 %v452, %v451
        %v466 = vpack.c.b16 %v454, %v453
        %v467 = vpack.c.b16 %v456, %v455
        %v468 = vpack.c.b16 %v458, %v457
        %v469 = vpack.c.b16 %v460, %v459
        %v470 = vpack.c.b16 %v462, %v461
        %479 = vmatprep.subr.bf16.mxu0 0
        %480 = vmatpush1.bf16.msra.mxu0 %v470
        %481 = vmatprep.subr.bf16.mxu0 0
        %482 = vmatpush1.bf16.msra.mxu0 %v469
        %483 = vmatprep.subr.bf16.mxu0 0
        %484 = vmatpush1.bf16.msra.mxu0 %v468
        %485 = vmatprep.subr.bf16.mxu0 0
        %486 = vmatpush1.bf16.msra.mxu0 %v467
        %487 = vmatprep.subr.bf16.mxu0 0
        %488 = vmatpush1.bf16.msra.mxu0 %v466
        %489 = vmatprep.subr.bf16.mxu0 0
        %490 = vmatpush1.bf16.msra.mxu0 %v465
        %491 = vmatprep.subr.bf16.mxu0 0
        %492 = vmatpush1.bf16.msra.mxu0 %v464
        %493 = vmatprep.subr.bf16.mxu0 0
        %494 = vmatpush1.bf16.msra.mxu0 %v463
        %495 = vmatprep.subr.bf16.mxu0 0
        %496 = vmatpush2.bf16.msra.mxu0 0
        %497 = vmatprep.subr.bf16.mxu0 0
        %498 = vmatpush2.bf16.msra.mxu0 0
        %499 = vmatprep.subr.bf16.mxu0 0
        %500 = vmatpush2.bf16.msra.mxu0 0
        %501 = vmatprep.subr.bf16.mxu0 0
        %502 = vmatpush2.bf16.msra.mxu0 0
        %503 = vmatprep.subr.bf16.mxu0 0
        %504 = vmatpush2.bf16.msra.mxu0 0
        %505 = vmatprep.subr.bf16.mxu0 0
        %506 = vmatpush2.bf16.msra.mxu0 0
        %507 = vmatprep.subr.bf16.mxu0 0
        %508 = vmatpush2.bf16.msra.mxu0 0
        %509 = vmatprep.subr.bf16.mxu0 0
        %510 = vmatpush2.bf16.msra.mxu0 0
        %511 = vmatprep.mubr.bf16.mxu0 0
        %512 = vmatmul.mubr.bf16.gmra.mxu0 %v407
        %v513 = vpop.f32.mrf.mxu0
        %v514 = vadd.f32 %v429, %v513
        %v515 = vpop.f32.mrf.mxu0
        %v516 = vpop.f32.mrf.mxu0
        %v517 = vpop.f32.mrf.mxu0
        %518 = vdwg.mxu0
        %v519 = vld [vmem:[#allocation8] sm:$0xf]
        %v520 = vld [vmem:[#allocation8 + $0x4] sm:$0xf]
        %v521 = vld [vmem:[#allocation8 + $0x8] sm:$0xf]
        %v522 = vld [vmem:[#allocation8 + $0xc] sm:$0xf]
        %v523 = vld [vmem:[#allocation8 + $0x10] sm:$0xf]
        %v524 = vld [vmem:[#allocation8 + $0x14] sm:$0xf]
        %v525 = vld [vmem:[#allocation8 + $0x18] sm:$0xf]
        %v526 = vld [vmem:[#allocation8 + $0x1c] sm:$0xf]
        %v527 = vld [vmem:[#allocation8 + $0x20] sm:$0xf]
        %v528 = vld [vmem:[#allocation8 + $0x24] sm:$0xf]
        %v529 = vld [vmem:[#allocation8 + $0x28] sm:$0xf]
        %v530 = vld [vmem:[#allocation8 + $0x2c] sm:$0xf]
        %v531 = vld [vmem:[#allocation8 + $0x30] sm:$0xf]
        %v532 = vld [vmem:[#allocation8 + $0x34] sm:$0xf]
        %v533 = vld [vmem:[#allocation8 + $0x38] sm:$0xf]
        %v534 = vld [vmem:[#allocation8 + $0x3c] sm:$0xf]
        %v535 = vld [vmem:[%s6] sm:$0x1]
        %v537 = vlaneseq
        %v538 = vshrl.u32 %v537, 7
        %v539 = vsub.s32 0, %v538
        %v540 = vrot.slane %v535, %v539
        %v558 = vunpack.c.l.b16 %v519
        %v559 = vunpack.c.l.b16 %v520
        %v560 = vunpack.c.l.b16 %v521
        %v561 = vunpack.c.l.b16 %v522
        %v562 = vunpack.c.l.b16 %v523
        %v563 = vunpack.c.l.b16 %v524
        %v564 = vunpack.c.l.b16 %v525
        %v565 = vunpack.c.l.b16 %v526
        %v566 = vunpack.c.l.b16 %v527
        %v567 = vunpack.c.l.b16 %v528
        %v568 = vunpack.c.l.b16 %v529
        %v569 = vunpack.c.l.b16 %v530
        %v570 = vunpack.c.l.b16 %v531
        %v571 = vunpack.c.l.b16 %v532
        %v572 = vunpack.c.l.b16 %v533
        %v573 = vunpack.c.l.b16 %v534
        %v574 = vpack.c.b16 %v559, %v558
        %v575 = vpack.c.b16 %v561, %v560
        %v576 = vpack.c.b16 %v563, %v562
        %v577 = vpack.c.b16 %v565, %v564
        %v578 = vpack.c.b16 %v567, %v566
        %v579 = vpack.c.b16 %v569, %v568
        %v580 = vpack.c.b16 %v571, %v570
        %v581 = vpack.c.b16 %v573, %v572
        %590 = vmatprep.subr.bf16.mxu0 0
        %591 = vmatpush1.bf16.msra.mxu0 %v581
        %592 = vmatprep.subr.bf16.mxu0 0
        %593 = vmatpush1.bf16.msra.mxu0 %v580
        %594 = vmatprep.subr.bf16.mxu0 0
        %595 = vmatpush1.bf16.msra.mxu0 %v579
        %596 = vmatprep.subr.bf16.mxu0 0
        %597 = vmatpush1.bf16.msra.mxu0 %v578
        %598 = vmatprep.subr.bf16.mxu0 0
        %599 = vmatpush1.bf16.msra.mxu0 %v577
        %600 = vmatprep.subr.bf16.mxu0 0
        %601 = vmatpush1.bf16.msra.mxu0 %v576
        %602 = vmatprep.subr.bf16.mxu0 0
        %603 = vmatpush1.bf16.msra.mxu0 %v575
        %604 = vmatprep.subr.bf16.mxu0 0
        %605 = vmatpush1.bf16.msra.mxu0 %v574
        %606 = vmatprep.subr.bf16.mxu0 0
        %607 = vmatpush2.bf16.msra.mxu0 0
        %608 = vmatprep.subr.bf16.mxu0 0
        %609 = vmatpush2.bf16.msra.mxu0 0
        %610 = vmatprep.subr.bf16.mxu0 0
        %611 = vmatpush2.bf16.msra.mxu0 0
        %612 = vmatprep.subr.bf16.mxu0 0
        %613 = vmatpush2.bf16.msra.mxu0 0
        %614 = vmatprep.subr.bf16.mxu0 0
        %615 = vmatpush2.bf16.msra.mxu0 0
        %616 = vmatprep.subr.bf16.mxu0 0
        %617 = vmatpush2.bf16.msra.mxu0 0
        %618 = vmatprep.subr.bf16.mxu0 0
        %619 = vmatpush2.bf16.msra.mxu0 0
        %620 = vmatprep.subr.bf16.mxu0 0
        %621 = vmatpush2.bf16.msra.mxu0 0
        %622 = vmatprep.mubr.bf16.mxu0 0
        %623 = vmatmul.mubr.bf16.gmra.mxu0 %v407
        %v624 = vpop.f32.mrf.mxu0
        %v625 = vadd.f32 %v540, %v624
        %v626 = vpop.f32.mrf.mxu0
        %v627 = vpop.f32.mrf.mxu0
        %v628 = vpop.f32.mrf.mxu0
        %629 = vdwg.mxu0
        %v630 = vmul.f32 %v514, %v514
        %631 = vadd.xlane.f32.xlu0 %v630
        %v632 = vpop.xlane.xlu0 %631
        %v633 = vrsqrt.pop %v632
        %v634 = vmul.f32 %v514, %v633
        %v635 = vmul.f32 %v634, %v625
        %v636 = vrot.slane %v635, 4
        %v637 = vadd.f32 %v635, %v636
        %v638 = vrot.slane %v637, 2
        %v639 = vadd.f32 %v637, %v638
        %v640 = vrot.slane %v639, 1
        %v641 = vadd.f32 %v639, %v640
        %v642 = vld [vmem:[#allocation5] sm:$0xf]
        %v643 = vld [vmem:[#allocation5 + $0x4] sm:$0xf]
        %v644 = vld [vmem:[#allocation5 + $0x8] sm:$0xf]
        %v645 = vld [vmem:[#allocation5 + $0xc] sm:$0xf]
        %v646 = vld [vmem:[#allocation5 + $0x10] sm:$0xf]
        %v647 = vld [vmem:[#allocation5 + $0x14] sm:$0xf]
        %v648 = vld [vmem:[#allocation5 + $0x18] sm:$0xf]
        %v649 = vld [vmem:[#allocation5 + $0x1c] sm:$0xf]
        %v650 = vld [vmem:[#allocation5 + $0x20] sm:$0xf]
        %v651 = vld [vmem:[#allocation5 + $0x24] sm:$0xf]
        %v652 = vld [vmem:[#allocation5 + $0x28] sm:$0xf]
        %v653 = vld [vmem:[#allocation5 + $0x2c] sm:$0xf]
        %v654 = vld [vmem:[#allocation5 + $0x30] sm:$0xf]
        %v655 = vld [vmem:[#allocation5 + $0x34] sm:$0xf]
        %v656 = vld [vmem:[#allocation5 + $0x38] sm:$0xf]
        %v657 = vld [vmem:[#allocation5 + $0x3c] sm:$0xf]
        %v658 = vld [vmem:[%s4] sm:$0x1]
        %v660 = vlaneseq
        %v661 = vshrl.u32 %v660, 7
        %v662 = vsub.s32 0, %v661
        %v663 = vrot.slane %v658, %v662
        %v681 = vunpack.c.l.b16 %v642
        %v682 = vunpack.c.l.b16 %v643
        %v683 = vunpack.c.l.b16 %v644
        %v684 = vunpack.c.l.b16 %v645
        %v685 = vunpack.c.l.b16 %v646
        %v686 = vunpack.c.l.b16 %v647
        %v687 = vunpack.c.l.b16 %v648
        %v688 = vunpack.c.l.b16 %v649
        %v689 = vunpack.c.l.b16 %v650
        %v690 = vunpack.c.l.b16 %v651
        %v691 = vunpack.c.l.b16 %v652
        %v692 = vunpack.c.l.b16 %v653
        %v693 = vunpack.c.l.b16 %v654
        %v694 = vunpack.c.l.b16 %v655
        %v695 = vunpack.c.l.b16 %v656
        %v696 = vunpack.c.l.b16 %v657
        %v697 = vpack.c.b16 %v682, %v681
        %v698 = vpack.c.b16 %v684, %v683
        %v699 = vpack.c.b16 %v686, %v685
        %v700 = vpack.c.b16 %v688, %v687
        %v701 = vpack.c.b16 %v690, %v689
        %v702 = vpack.c.b16 %v692, %v691
        %v703 = vpack.c.b16 %v694, %v693
        %v704 = vpack.c.b16 %v696, %v695
        %713 = vmatprep.subr.bf16.mxu0 0
        %714 = vmatpush1.bf16.msra.mxu0 %v704
        %715 = vmatprep.subr.bf16.mxu0 0
        %716 = vmatpush1.bf16.msra.mxu0 %v703
        %717 = vmatprep.subr.bf16.mxu0 0
        %718 = vmatpush1.bf16.msra.mxu0 %v702
        %719 = vmatprep.subr.bf16.mxu0 0
        %720 = vmatpush1.bf16.msra.mxu0 %v701
        %721 = vmatprep.subr.bf16.mxu0 0
        %722 = vmatpush1.bf16.msra.mxu0 %v700
        %723 = vmatprep.subr.bf16.mxu0 0
        %724 = vmatpush1.bf16.msra.mxu0 %v699
        %725 = vmatprep.subr.bf16.mxu0 0
        %726 = vmatpush1.bf16.msra.mxu0 %v698
        %727 = vmatprep.subr.bf16.mxu0 0
        %728 = vmatpush1.bf16.msra.mxu0 %v697
        %729 = vmatprep.subr.bf16.mxu0 0
        %730 = vmatpush2.bf16.msra.mxu0 0
        %731 = vmatprep.subr.bf16.mxu0 0
        %732 = vmatpush2.bf16.msra.mxu0 0
        %733 = vmatprep.subr.bf16.mxu0 0
        %734 = vmatpush2.bf16.msra.mxu0 0
        %735 = vmatprep.subr.bf16.mxu0 0
        %736 = vmatpush2.bf16.msra.mxu0 0
        %737 = vmatprep.subr.bf16.mxu0 0
        %738 = vmatpush2.bf16.msra.mxu0 0
        %739 = vmatprep.subr.bf16.mxu0 0
        %740 = vmatpush2.bf16.msra.mxu0 0
        %741 = vmatprep.subr.bf16.mxu0 0
        %742 = vmatpush2.bf16.msra.mxu0 0
        %743 = vmatprep.subr.bf16.mxu0 0
        %744 = vmatpush2.bf16.msra.mxu0 0
        %745 = vmatprep.mubr.bf16.mxu0 0
        %746 = vmatmul.mubr.bf16.gmra.mxu0 %v407
        %v747 = vpop.f32.mrf.mxu0
        %v748 = vadd.f32 %v663, %v747
        %v749 = vpop.f32.mrf.mxu0
        %v750 = vpop.f32.mrf.mxu0
        %v751 = vpop.f32.mrf.mxu0
        %752 = vdwg.mxu0
        %v753 = vmul.f32 %v748, %v748
        %754 = vadd.xlane.f32.xlu0 %v753
        %v755 = vpop.xlane.xlu0 %754
        %v756 = vrsqrt.pop %v755
        %v757 = vmul.f32 %v748, %v756
        %v758 = vpack.c.bf16 %v641, %v641
        %v759 = vpack.c.bf16 %v757, %v757
        %v760 = vmul.bf16 %v758, %v759
        %v761 = vld [vmem:[#allocation10] sm:$0xf]
        %v762 = vld [vmem:[#allocation10 + $0x4] sm:$0xf]
        %v763 = vld [vmem:[#allocation10 + $0x8] sm:$0xf]
        %v764 = vld [vmem:[#allocation10 + $0xc] sm:$0xf]
        %v765 = vld [vmem:[#allocation10 + $0x10] sm:$0xf]
        %v766 = vld [vmem:[#allocation10 + $0x14] sm:$0xf]
        %v767 = vld [vmem:[#allocation10 + $0x18] sm:$0xf]
        %v768 = vld [vmem:[#allocation10 + $0x1c] sm:$0xf]
        %v769 = vld [vmem:[#allocation10 + $0x20] sm:$0xf]
        %v770 = vld [vmem:[#allocation10 + $0x24] sm:$0xf]
        %v771 = vld [vmem:[#allocation10 + $0x28] sm:$0xf]
        %v772 = vld [vmem:[#allocation10 + $0x2c] sm:$0xf]
        %v773 = vld [vmem:[#allocation10 + $0x30] sm:$0xf]
        %v774 = vld [vmem:[#allocation10 + $0x34] sm:$0xf]
        %v775 = vld [vmem:[#allocation10 + $0x38] sm:$0xf]
        %v776 = vld [vmem:[#allocation10 + $0x3c] sm:$0xf]
        %v777 = vld [vmem:[%s8] sm:$0x1]
        %v779 = vlaneseq
        %v780 = vshrl.u32 %v779, 7
        %v781 = vsub.s32 0, %v780
        %v782 = vrot.slane %v777, %v781
        %v800 = vunpack.c.l.b16 %v761
        %v801 = vunpack.c.l.b16 %v762
        %v802 = vunpack.c.l.b16 %v763
        %v803 = vunpack.c.l.b16 %v764
        %v804 = vunpack.c.l.b16 %v765
        %v805 = vunpack.c.l.b16 %v766
        %v806 = vunpack.c.l.b16 %v767
        %v807 = vunpack.c.l.b16 %v768
        %v808 = vunpack.c.l.b16 %v769
        %v809 = vunpack.c.l.b16 %v770
        %v810 = vunpack.c.l.b16 %v771
        %v811 = vunpack.c.l.b16 %v772
        %v812 = vunpack.c.l.b16 %v773
        %v813 = vunpack.c.l.b16 %v774
        %v814 = vunpack.c.l.b16 %v775
        %v815 = vunpack.c.l.b16 %v776
        %v816 = vpack.c.b16 %v801, %v800
        %v817 = vpack.c.b16 %v803, %v802
        %v818 = vpack.c.b16 %v805, %v804
        %v819 = vpack.c.b16 %v807, %v806
        %v820 = vpack.c.b16 %v809, %v808
        %v821 = vpack.c.b16 %v811, %v810
        %v822 = vpack.c.b16 %v813, %v812
        %v823 = vpack.c.b16 %v815, %v814
        %832 = vmatprep.subr.bf16.mxu0 0
        %833 = vmatpush1.bf16.msra.mxu0 %v823
        %834 = vmatprep.subr.bf16.mxu0 0
        %835 = vmatpush1.bf16.msra.mxu0 %v822
        %836 = vmatprep.subr.bf16.mxu0 0
        %837 = vmatpush1.bf16.msra.mxu0 %v821
        %838 = vmatprep.subr.bf16.mxu0 0
        %839 = vmatpush1.bf16.msra.mxu0 %v820
        %840 = vmatprep.subr.bf16.mxu0 0
        %841 = vmatpush1.bf16.msra.mxu0 %v819
        %842 = vmatprep.subr.bf16.mxu0 0
        %843 = vmatpush1.bf16.msra.mxu0 %v818
        %844 = vmatprep.subr.bf16.mxu0 0
        %845 = vmatpush1.bf16.msra.mxu0 %v817
        %846 = vmatprep.subr.bf16.mxu0 0
        %847 = vmatpush1.bf16.msra.mxu0 %v816
        %848 = vmatprep.subr.bf16.mxu0 0
        %849 = vmatpush2.bf16.msra.mxu0 0
        %850 = vmatprep.subr.bf16.mxu0 0
        %851 = vmatpush2.bf16.msra.mxu0 0
        %852 = vmatprep.subr.bf16.mxu0 0
        %853 = vmatpush2.bf16.msra.mxu0 0
        %854 = vmatprep.subr.bf16.mxu0 0
        %855 = vmatpush2.bf16.msra.mxu0 0
        %856 = vmatprep.subr.bf16.mxu0 0
        %857 = vmatpush2.bf16.msra.mxu0 0
        %858 = vmatprep.subr.bf16.mxu0 0
        %859 = vmatpush2.bf16.msra.mxu0 0
        %860 = vmatprep.subr.bf16.mxu0 0
        %861 = vmatpush2.bf16.msra.mxu0 0
        %862 = vmatprep.subr.bf16.mxu0 0
        %863 = vmatpush2.bf16.msra.mxu0 0
        %864 = vmatprep.mubr.bf16.mxu0 0
        %865 = vmatmul.mubr.bf16.gmra.mxu0 %v760
        %v866 = vpop.f32.mrf.mxu0
        %v867 = vadd.f32 %v782, %v866
        %v868 = vpop.f32.mrf.mxu0
        %v869 = vpop.f32.mrf.mxu0
        %v870 = vpop.f32.mrf.mxu0
        %871 = vdwg.mxu0
        %872 = vst [vmem:[%s405] sm:$0xff] %v867
        %s873 = sand.u32 %s230, 1
        %s874 = scalar_lea.sflag [#allocation4], %s873
        %s875 = sand.u32 %s230, 1
        %s876 = smul.addr %s875, 8
        %s877 = scalar_lea.vmem [#allocation11], %s876
        // Predicated region
        $region77: #{tpu_custom_call.1} parent=55 // pred_check
          %p878 = pneg %p240
        $region78: #{tpu_custom_call.1} parent=55 // pred_check_branch
          %880 = sbr.rel (%p878) target = $region80
        $region79: #{tpu_custom_call.1} parent=55 // pred_region
          %s882 = ssub.s32 128, 128
          %883 = vsyncadd %s874, %s882
          %s884 = smul.addr %s28, 128
          %s885 = scalar_lea.hbm %s9, %s884
          %s887 = sshll.u32 %s877, 4
          %s888 = int_to_ptr.vmem [resolvable:$true] %s887
          %890 = dma.vmem_to_hbm [thread:$0]  %s888, 128, %s885, %s874
        $region80: #{tpu_custom_call.1} parent=55 // pred_fallthru
          _
      $region56: #{tpu_custom_call.1} parent=5 // pred_fallthru
        _
      %p891 = scmp.le.s32.totalorder 2, %s23
      // Predicated region
      $region81: #{tpu_custom_call.1} parent=5 // pred_check
        %p892 = pneg %p891
      $region82: #{tpu_custom_call.1} parent=5 // pred_check_branch
        %894 = sbr.rel (%p892) target = $region84
      $region83: #{tpu_custom_call.1} parent=5 // pred_region
        %s895 = ssub.s32 %s23, 2
        // Predicated region
        $region85: #{tpu_custom_call.1} parent=83 // pred_check
          %p896 = pneg %p246
        $region86: #{tpu_custom_call.1} parent=83 // pred_check_branch
          %898 = sbr.rel (%p896) target = $region88
        $region87: #{tpu_custom_call.1} parent=83 // pred_region
          %s899 = sand.u32 %s231, 1
          %s900 = scalar_lea.sflag [#allocation4], %s899
          %s901 = sand.u32 %s231, 1
          %s902 = smul.addr %s901, 8
          %s903 = scalar_lea.vmem [#allocation11], %s902
          %904 = dma.done %s900, 128
        $region88: #{tpu_custom_call.1} parent=83 // pred_fallthru
          _
      $region84: #{tpu_custom_call.1} parent=5 // pred_fallthru
        _
    $region6: #{tpu_custom_call.1} parent=1 // loop_footer
      %s27 = sadd.s32 1, %s23
    $region7: #{tpu_custom_call.1} parent=1 // loop_footer_branch
      %22 = sbr.rel target = $region3
    $region8: #{tpu_custom_call.1} parent=1 // loop_exit
      _
    %905 = vsyncpa [#allocation3], 1
    %s906 = scalar_lea.sflag [#allocation3], 1
    %907 = vsyncpa %s906, 1
    %908 = vsyncpa [#allocation6], 1
    %909 = vsyncpa [#allocation9], 1
    %910 = vsyncpa [#allocation4], 1
    %s911 = scalar_lea.sflag [#allocation4], 1
    %912 = vsyncpa %s911, 1

// kernel: tpu_custom_call.1
$region0: #{tpu_custom_call.1}
  #allocation0 [shape = 'u32[]', space=smem, size = 0x4, offset = 0x4, fixed_abs, tag = 'smem constant byte address 0x4 - core index']
  #allocation1 [shape = 'u32[144,128]{1,0:T(1,128)}', space=vmem, size = 0x12000, scoped, tag = 'internal scratch']
  %s0 = inlined_call_operand.hbm [shape: bf16[16,128], index: 0, kind: input, shape index: {}]
  %s1 = inlined_call_operand.hbm [shape: bf16[128,128], index: 1, kind: input, shape index: {}]
  %s2 = inlined_call_operand.hbm [shape: bf16[128,128], index: 2, kind: input, shape index: {}]
  %s3 = inlined_call_operand.hbm [shape: bf16[128,128], index: 3, kind: input, shape index: {}]
  %s4 = inlined_call_operand.vmem [shape: f32[1,128], index: 4, kind: input, shape index: {}]
  %s5 = inlined_call_operand.vmem [shape: f32[1,128], index: 5, kind: input, shape index: {}]
  %s6 = inlined_call_operand.vmem [shape: f32[1,128], index: 6, kind: input, shape index: {}]
  %s7 = inlined_call_operand.hbm [shape: bf16[128,128], index: 7, kind: input, shape index: {}]
  %s8 = inlined_call_operand.vmem [shape: f32[1,128], index: 8, kind: input, shape index: {}]
  %s9 = inlined_call_operand.hbm [shape: f32[16,128], index: 9, kind: output, shape index: {}]
  %s10 = sld [smem:[#allocation0]]
  $region89: #{tpu_custom_call.1} parent=0
    _
  %s12 = ssub.s32 1, %s10
  %s13 = scalar_select 0, %s12, %s10
  $region1: #{tpu_custom_call.1} parent=0
    #allocation2 [shape = 'u8[4096]{0}', space=vmem, size = 0x1000, scoped, tag = 'input window, operand 0']
    #allocation3 [shape = 's32[2]{0}', space=sflag, size = 0x8, scoped, tag = 'scoped memory for tpu_custom_call.1']
    #allocation4 [shape = 's32[2]{0}', space=sflag, size = 0x8, scoped, tag = 'scoped memory for tpu_custom_call.1']
    #allocation5 [shape = 'u8[32768]{0}', space=vmem, size = 0x8000, scoped, tag = 'input window, operand 1, single buffered']
    #allocation6 [shape = 's32[1]{0}', space=sflag, size = 0x4, scoped, tag = 'scoped memory for tpu_custom_call.1']
    #allocation7 [shape = 'u8[32768]{0}', space=vmem, size = 0x8000, scoped, tag = 'input window, operand 2, single buffered']
    #allocation8 [shape = 'u8[32768]{0}', space=vmem, size = 0x8000, scoped, tag = 'input window, operand 3, single buffered']
    #allocation9 [shape = 's32[1]{0}', space=sflag, size = 0x4, scoped, tag = 'scoped memory for tpu_custom_call.1']
    #allocation10 [shape = 'u8[32768]{0}', space=vmem, size = 0x8000, scoped, tag = 'input window, operand 7, single buffered']
    #allocation11 [shape = 'u8[8192]{0}', space=vmem, size = 0x2000, scoped, tag = 'output window, operand 0']
    %14 = vsyncpa [#allocation3], 0
    %s15 = scalar_lea.sflag [#allocation3], 1
    %16 = vsyncpa %s15, 0
    %17 = vsyncpa [#allocation6], 0
    %18 = vsyncpa [#allocation9], 0
    %19 = vsyncpa [#allocation4], 0
    %s20 = scalar_lea.sflag [#allocation4], 1
    %21 = vsyncpa %s20, 0
    loop: start=0, step=1, limit=4
    $region2: #{tpu_custom_call.1} parent=1 // loop_pre_header
      _
    $region3: #{tpu_custom_call.1} parent=1 // loop_header
      %s23 = sphi 0, %s27
      %p24 = scmp.ge.s32.totalorder %s23, 4
      %s33 = sphi 0, %s35
      %s36 = sphi 0, %s33
      %s37 = sphi 0, %s36
      %s53 = sphi 0, %s37
      %s57 = sphi 0, %s57
      %s59 = sphi 0, %s57
      %s60 = sphi 0, %s59
      %s74 = sphi 0, %s60
      %s78 = sphi 0, %s78
      %s80 = sphi 0, %s78
      %s81 = sphi 0, %s80
      %s95 = sphi 0, %s81
      %s99 = sphi 0, %s99
      %s101 = sphi 0, %s99
      %s102 = sphi 0, %s101
      %s116 = sphi 0, %s102
      %s120 = sphi 0, %s120
      %s122 = sphi 0, %s120
      %s123 = sphi 0, %s122
      %s137 = sphi 0, %s123
      %s141 = sphi 0, %s141
      %s143 = sphi 0, %s141
      %s144 = sphi 0, %s143
      %s158 = sphi 0, %s144
      %s162 = sphi 0, %s162
      %s164 = sphi 0, %s162
      %s165 = sphi 0, %s164
      %s179 = sphi 0, %s165
      %s183 = sphi 0, %s183
      %s185 = sphi 0, %s183
      %s186 = sphi 0, %s185
      %s200 = sphi 0, %s186
      %s204 = sphi 0, %s204
      %s206 = sphi 0, %s204
      %s207 = sphi 0, %s206
      %s221 = sphi 0, %s207
      %s227 = sphi 0, %s229
      %s230 = sphi 0, %s227
      %s231 = sphi 0, %s230
      %s247 = sphi 0, %s231
    $region4: #{tpu_custom_call.1} parent=1 // loop_header_branch
      %26 = sbr.rel (%p24) target = $region8
    $region5: #{tpu_custom_call.1} parent=1 // loop_body
      %s28 = ssub.s32 %s23, 1
      %s29 = ssub.s32 %s23, 2
      %s30 = sadd.s32 %s23, 1
      %s31 = ssub.s32 %s23, %s30
      %p32 = scmp.eq.s32.totalorder %s31, 0
      %s34 = sadd.s32 %s33, 1
      %s35 = scalar_select %p32, %s33, %s34
      %p38 = pneg %p32
      %p39 = scmp.eq.s32.totalorder %s23, 1
      %p40 = por %p38, %p39
      %p41 = scmp.ne.s32.totalorder %s33, %s36
      %p42 = scmp.eq.s32.totalorder %s23, 0
      %p43 = por %p41, %p42
      %p44 = scmp.ne.s32.totalorder %s33, %s36
      %p45 = scmp.eq.s32.totalorder %s28, 1
      %p46 = por %p44, %p45
      %p47 = scmp.ne.s32.totalorder %s36, %s37
      %p48 = scmp.eq.s32.totalorder %s28, 0
      %p49 = por %p47, %p48
      %p50 = scmp.ne.s32.totalorder %s36, %s37
      %p51 = scmp.eq.s32.totalorder %s29, 1
      %p52 = por %p50, %p51
      %p54 = scmp.ne.s32.totalorder %s37, %s53
      %p55 = scmp.eq.s32.totalorder %s29, 0
      %p56 = por %p54, %p55
      %s58 = sadd.s32 %s57, 1
      %p61 = scmp.eq.s32.totalorder %s23, 1
      %p62 = scmp.ne.s32.totalorder %s57, %s59
      %p63 = scmp.eq.s32.totalorder %s23, 0
      %p64 = por %p62, %p63
      %p65 = scmp.ne.s32.totalorder %s57, %s59
      %p66 = scmp.eq.s32.totalorder %s28, 1
      %p67 = por %p65, %p66
      %p68 = scmp.ne.s32.totalorder %s59, %s60
      %p69 = scmp.eq.s32.totalorder %s28, 0
      %p70 = por %p68, %p69
      %p71 = scmp.ne.s32.totalorder %s59, %s60
      %p72 = scmp.eq.s32.totalorder %s29, 1
      %p73 = por %p71, %p72
      %p75 = scmp.ne.s32.totalorder %s60, %s74
      %p76 = scmp.eq.s32.totalorder %s29, 0
      %p77 = por %p75, %p76
      %s79 = sadd.s32 %s78, 1
      %p82 = scmp.eq.s32.totalorder %s23, 1
      %p83 = scmp.ne.s32.totalorder %s78, %s80
      %p84 = scmp.eq.s32.totalorder %s23, 0
      %p85 = por %p83, %p84
      %p86 = scmp.ne.s32.totalorder %s78, %s80
      %p87 = scmp.eq.s32.totalorder %s28, 1
      %p88 = por %p86, %p87
      %p89 = scmp.ne.s32.totalorder %s80, %s81
      %p90 = scmp.eq.s32.totalorder %s28, 0
      %p91 = por %p89, %p90
      %p92 = scmp.ne.s32.totalorder %s80, %s81
      %p93 = scmp.eq.s32.totalorder %s29, 1
      %p94 = por %p92, %p93
      %p96 = scmp.ne.s32.totalorder %s81, %s95
      %p97 = scmp.eq.s32.totalorder %s29, 0
      %p98 = por %p96, %p97
      %s100 = sadd.s32 %s99, 1
      %p103 = scmp.eq.s32.totalorder %s23, 1
      %p104 = scmp.ne.s32.totalorder %s99, %s101
      %p105 = scmp.eq.s32.totalorder %s23, 0
      %p106 = por %p104, %p105
      %p107 = scmp.ne.s32.totalorder %s99, %s101
      %p108 = scmp.eq.s32.totalorder %s28, 1
      %p109 = por %p107, %p108
      %p110 = scmp.ne.s32.totalorder %s101, %s102
      %p111 = scmp.eq.s32.totalorder %s28, 0
      %p112 = por %p110, %p111
      %p113 = scmp.ne.s32.totalorder %s101, %s102
      %p114 = scmp.eq.s32.totalorder %s29, 1
      %p115 = por %p113, %p114
      %p117 = scmp.ne.s32.totalorder %s102, %s116
      %p118 = scmp.eq.s32.totalorder %s29, 0
      %p119 = por %p117, %p118
      %s121 = sadd.s32 %s120, 1
      %p124 = scmp.eq.s32.totalorder %s23, 1
      %p125 = scmp.ne.s32.totalorder %s120, %s122
      %p126 = scmp.eq.s32.totalorder %s23, 0
      %p127 = por %p125, %p126
      %p128 = scmp.ne.s32.totalorder %s120, %s122
      %p129 = scmp.eq.s32.totalorder %s28, 1
      %p130 = por %p128, %p129
      %p131 = scmp.ne.s32.totalorder %s122, %s123
      %p132 = scmp.eq.s32.totalorder %s28, 0
      %p133 = por %p131, %p132
      %p134 = scmp.ne.s32.totalorder %s122, %s123
      %p135 = scmp.eq.s32.totalorder %s29, 1
      %p136 = por %p134, %p135
      %p138 = scmp.ne.s32.totalorder %s123, %s137
      %p139 = scmp.eq.s32.totalorder %s29, 0
      %p140 = por %p138, %p139
      %s142 = sadd.s32 %s141, 1
      %p145 = scmp.eq.s32.totalorder %s23, 1
      %p146 = scmp.ne.s32.totalorder %s141, %s143
      %p147 = scmp.eq.s32.totalorder %s23, 0
      %p148 = por %p146, %p147
      %p149 = scmp.ne.s32.totalorder %s141, %s143
      %p150 = scmp.eq.s32.totalorder %s28, 1
      %p151 = por %p149, %p150
      %p152 = scmp.ne.s32.totalorder %s143, %s144
      %p153 = scmp.eq.s32.totalorder %s28, 0
      %p154 = por %p152, %p153
      %p155 = scmp.ne.s32.totalorder %s143, %s144
      %p156 = scmp.eq.s32.totalorder %s29, 1
      %p157 = por %p155, %p156
      %p159 = scmp.ne.s32.totalorder %s144, %s158
      %p160 = scmp.eq.s32.totalorder %s29, 0
      %p161 = por %p159, %p160
      %s163 = sadd.s32 %s162, 1
      %p166 = scmp.eq.s32.totalorder %s23, 1
      %p167 = scmp.ne.s32.totalorder %s162, %s164
      %p168 = scmp.eq.s32.totalorder %s23, 0
      %p169 = por %p167, %p168
      %p170 = scmp.ne.s32.totalorder %s162, %s164
      %p171 = scmp.eq.s32.totalorder %s28, 1
      %p172 = por %p170, %p171
      %p173 = scmp.ne.s32.totalorder %s164, %s165
      %p174 = scmp.eq.s32.totalorder %s28, 0
      %p175 = por %p173, %p174
      %p176 = scmp.ne.s32.totalorder %s164, %s165
      %p177 = scmp.eq.s32.totalorder %s29, 1
      %p178 = por %p176, %p177
      %p180 = scmp.ne.s32.totalorder %s165, %s179
      %p181 = scmp.eq.s32.totalorder %s29, 0
      %p182 = por %p180, %p181
      %s184 = sadd.s32 %s183, 1
      %p187 = scmp.eq.s32.totalorder %s23, 1
      %p188 = scmp.ne.s32.totalorder %s183, %s185
      %p189 = scmp.eq.s32.totalorder %s23, 0
      %p190 = por %p188, %p189
      %p191 = scmp.ne.s32.totalorder %s183, %s185
      %p192 = scmp.eq.s32.totalorder %s28, 1
      %p193 = por %p191, %p192
      %p194 = scmp.ne.s32.totalorder %s185, %s186
      %p195 = scmp.eq.s32.totalorder %s28, 0
      %p196 = por %p194, %p195
      %p197 = scmp.ne.s32.totalorder %s185, %s186
      %p198 = scmp.eq.s32.totalorder %s29, 1
      %p199 = por %p197, %p198
      %p201 = scmp.ne.s32.totalorder %s186, %s200
      %p202 = scmp.eq.s32.totalorder %s29, 0
      %p203 = por %p201, %p202
      %s205 = sadd.s32 %s204, 1
      %p208 = scmp.eq.s32.totalorder %s23, 1
      %p209 = scmp.ne.s32.totalorder %s204, %s206
      %p210 = scmp.eq.s32.totalorder %s23, 0
      %p211 = por %p209, %p210
      %p212 = scmp.ne.s32.totalorder %s204, %s206
      %p213 = scmp.eq.s32.totalorder %s28, 1
      %p214 = por %p212, %p213
      %p215 = scmp.ne.s32.totalorder %s206, %s207
      %p216 = scmp.eq.s32.totalorder %s28, 0
      %p217 = por %p215, %p216
      %p218 = scmp.ne.s32.totalorder %s206, %s207
      %p219 = scmp.eq.s32.totalorder %s29, 1
      %p220 = por %p218, %p219
      %p222 = scmp.ne.s32.totalorder %s207, %s221
      %p223 = scmp.eq.s32.totalorder %s29, 0
      %p224 = por %p222, %p223
      %s225 = ssub.s32 %s23, %s30
      %p226 = scmp.eq.s32.totalorder %s225, 0
      %s228 = sadd.s32 %s227, 1
      %s229 = scalar_select %p226, %s227, %s228
      %p232 = pneg %p226
      %p233 = scmp.eq.s32.totalorder %s23, 1
      %p234 = por %p232, %p233
      %p235 = scmp.ne.s32.totalorder %s227, %s230
      %p236 = scmp.eq.s32.totalorder %s23, 0
      %p237 = por %p235, %p236
      %p238 = scmp.ne.s32.totalorder %s227, %s230
      %p239 = scmp.eq.s32.totalorder %s28, 1
      %p240 = por %p238, %p239
      %p241 = scmp.ne.s32.totalorder %s230, %s231
      %p242 = scmp.eq.s32.totalorder %s28, 0
      %p243 = por %p241, %p242
      %p244 = scmp.ne.s32.totalorder %s230, %s231
      %p245 = scmp.eq.s32.totalorder %s29, 1
      %p246 = por %p244, %p245
      %p248 = scmp.ne.s32.totalorder %s231, %s247
      %p249 = scmp.eq.s32.totalorder %s29, 0
      %p250 = por %p248, %p249
      %p251 = scmp.le.s32.totalorder 1, %s23
      %p252 = scmp.lt.s32.totalorder %s23, 3
      %p253 = pnand %p251, %p252
      %p254 = pneg %p253
      // Predicated region
      $region9: #{tpu_custom_call.1} parent=5 // pred_check
        _
      $region10: #{tpu_custom_call.1} parent=5 // pred_check_branch
        %256 = sbr.rel (%p253) target = $region12
      $region11: #{tpu_custom_call.1} parent=5 // pred_region
        %s257 = ssub.s32 %s23, 1
        // Predicated region
        $region13: #{tpu_custom_call.1} parent=11 // pred_check
          %p258 = pneg %p70
        $region14: #{tpu_custom_call.1} parent=11 // pred_check_branch
          %260 = sbr.rel (%p258) target = $region16
        $region15: #{tpu_custom_call.1} parent=11 // pred_region
          %s262 = ssub.s32 1024, 1024
          %263 = vsyncadd [#allocation6], %s262
          %s264 = sshll.u32 [#allocation5], 4
          %s265 = int_to_ptr.vmem [resolvable:$true] %s264
          %270 = dma.hbm_to_vmem [thread:$0]  %s1, 1024, %s265, [#allocation6], 64, 64, 4
        $region16: #{tpu_custom_call.1} parent=11 // pred_fallthru
          _
        // Predicated region
        $region17: #{tpu_custom_call.1} parent=11 // pred_check
          %p271 = pneg %p91
        $region18: #{tpu_custom_call.1} parent=11 // pred_check_branch
          %273 = sbr.rel (%p271) target = $region20
        $region19: #{tpu_custom_call.1} parent=11 // pred_region
          %s275 = ssub.s32 1024, 1024
          %276 = vsyncadd [#allocation6], %s275
          %s277 = sshll.u32 [#allocation7], 4
          %s278 = int_to_ptr.vmem [resolvable:$true] %s277
          %283 = dma.hbm_to_vmem [thread:$0]  %s2, 1024, %s278, [#allocation6], 64, 64, 4
        $region20: #{tpu_custom_call.1} parent=11 // pred_fallthru
          _
        // Predicated region
        $region21: #{tpu_custom_call.1} parent=11 // pred_check
          %p284 = pneg %p112
        $region22: #{tpu_custom_call.1} parent=11 // pred_check_branch
          %286 = sbr.rel (%p284) target = $region24
        $region23: #{tpu_custom_call.1} parent=11 // pred_region
          %s288 = ssub.s32 1024, 1024
          %289 = vsyncadd [#allocation9], %s288
          %s290 = sshll.u32 [#allocation8], 4
          %s291 = int_to_ptr.vmem [resolvable:$true] %s290
          %296 = dma.hbm_to_vmem [thread:$0]  %s3, 1024, %s291, [#allocation9], 64, 64, 4
        $region24: #{tpu_custom_call.1} parent=11 // pred_fallthru
          _
        // Predicated region
        $region25: #{tpu_custom_call.1} parent=11 // pred_check
          %p297 = pneg %p133
        $region26: #{tpu_custom_call.1} parent=11 // pred_check_branch
          %299 = sbr.rel (%p297) target = $region28
        $region27: #{tpu_custom_call.1} parent=11 // pred_region
          _
        $region28: #{tpu_custom_call.1} parent=11 // pred_fallthru
          _
        // Predicated region
        $region29: #{tpu_custom_call.1} parent=11 // pred_check
          %p300 = pneg %p154
        $region30: #{tpu_custom_call.1} parent=11 // pred_check_branch
          %302 = sbr.rel (%p300) target = $region32
        $region31: #{tpu_custom_call.1} parent=11 // pred_region
          _
        $region32: #{tpu_custom_call.1} parent=11 // pred_fallthru
          _
        // Predicated region
        $region33: #{tpu_custom_call.1} parent=11 // pred_check
          %p303 = pneg %p175
        $region34: #{tpu_custom_call.1} parent=11 // pred_check_branch
          %305 = sbr.rel (%p303) target = $region36
        $region35: #{tpu_custom_call.1} parent=11 // pred_region
          _
        $region36: #{tpu_custom_call.1} parent=11 // pred_fallthru
          _
        // Predicated region
        $region37: #{tpu_custom_call.1} parent=11 // pred_check
          %p306 = pneg %p196
        $region38: #{tpu_custom_call.1} parent=11 // pred_check_branch
          %308 = sbr.rel (%p306) target = $region40
        $region39: #{tpu_custom_call.1} parent=11 // pred_region
          %s310 = ssub.s32 1024, 1024
          %311 = vsyncadd [#allocation9], %s310
          %s312 = sshll.u32 [#allocation10], 4
          %s313 = int_to_ptr.vmem [resolvable:$true] %s312
          %318 = dma.hbm_to_vmem [thread:$0]  %s7, 1024, %s313, [#allocation9], 64, 64, 4
        $region40: #{tpu_custom_call.1} parent=11 // pred_fallthru
          _
        // Predicated region
        $region41: #{tpu_custom_call.1} parent=11 // pred_check
          %p319 = pneg %p217
        $region42: #{tpu_custom_call.1} parent=11 // pred_check_branch
          %321 = sbr.rel (%p319) target = $region44
        $region43: #{tpu_custom_call.1} parent=11 // pred_region
          _
        $region44: #{tpu_custom_call.1} parent=11 // pred_fallthru
          _
      $region12: #{tpu_custom_call.1} parent=5 // pred_fallthru
        _
      %p322 = scmp.lt.s32.totalorder %s23, 2
      // Predicated region
      $region45: #{tpu_custom_call.1} parent=5 // pred_check
        %p323 = pneg %p322
      $region46: #{tpu_custom_call.1} parent=5 // pred_check_branch
        %325 = sbr.rel (%p323) target = $region48
      $region47: #{tpu_custom_call.1} parent=5 // pred_region
        // Predicated region
        $region49: #{tpu_custom_call.1} parent=47 // pred_check
          %p326 = pneg %p43
        $region50: #{tpu_custom_call.1} parent=47 // pred_check_branch
          %328 = sbr.rel (%p326) target = $region52
        $region51: #{tpu_custom_call.1} parent=47 // pred_region
          %s329 = sand.u32 %s33, 1
          %s330 = scalar_lea.sflag [#allocation3], %s329
          %s331 = sand.u32 %s33, 1
          %s332 = smul.addr %s331, 4
          %s333 = scalar_lea.vmem [#allocation2], %s332
          %s335 = ssub.s32 64, 64
          %336 = vsyncadd %s330, %s335
          %s337 = smul.addr %s23, 64
          %s338 = scalar_lea.hbm %s0, %s337
          %s340 = sshll.u32 %s333, 4
          %s341 = int_to_ptr.vmem [resolvable:$true] %s340
          %343 = dma.hbm_to_vmem [thread:$0]  %s338, 64, %s341, %s330
        $region52: #{tpu_custom_call.1} parent=47 // pred_fallthru
          _
      $region48: #{tpu_custom_call.1} parent=5 // pred_fallthru
        _
      %p344 = scmp.le.s32.totalorder 1, %s23
      %p345 = scmp.lt.s32.totalorder %s23, 3
      %p346 = pnand %p344, %p345
      %p347 = pneg %p346
      // Predicated region
      $region53: #{tpu_custom_call.1} parent=5 // pred_check
        _
      $region54: #{tpu_custom_call.1} parent=5 // pred_check_branch
        %349 = sbr.rel (%p346) target = $region56
      $region55: #{tpu_custom_call.1} parent=5 // pred_region
        %s350 = ssub.s32 %s23, 1
        %s351 = sand.u32 %s36, 1
        %s352 = scalar_lea.sflag [#allocation3], %s351
        %s353 = sand.u32 %s36, 1
        %s354 = smul.addr %s353, 4
        %s355 = scalar_lea.vmem [#allocation2], %s354
        // Predicated region
        $region57: #{tpu_custom_call.1} parent=55 // pred_check
          %p356 = pneg %p49
        $region58: #{tpu_custom_call.1} parent=55 // pred_check_branch
          %358 = sbr.rel (%p356) target = $region60
        $region59: #{tpu_custom_call.1} parent=55 // pred_region
          %359 = dma.done %s352, 64
        $region60: #{tpu_custom_call.1} parent=55 // pred_fallthru
          _
        // Predicated region
        $region61: #{tpu_custom_call.1} parent=55 // pred_check
          %p360 = pneg %p70
        $region62: #{tpu_custom_call.1} parent=55 // pred_check_branch
          %362 = sbr.rel (%p360) target = $region64
        $region63: #{tpu_custom_call.1} parent=55 // pred_region
          %363 = dma.done [#allocation6], 1024
        $region64: #{tpu_custom_call.1} parent=55 // pred_fallthru
          _
        // Predicated region
        $region65: #{tpu_custom_call.1} parent=55 // pred_check
          %p364 = pneg %p91
        $region66: #{tpu_custom_call.1} parent=55 // pred_check_branch
          %366 = sbr.rel (%p364) target = $region68
        $region67: #{tpu_custom_call.1} parent=55 // pred_region
          %367 = dma.done [#allocation6], 1024
        $region68: #{tpu_custom_call.1} parent=55 // pred_fallthru
          _
        // Predicated region
        $region69: #{tpu_custom_call.1} parent=55 // pred_check
          %p368 = pneg %p112
        $region70: #{tpu_custom_call.1} parent=55 // pred_check_branch
          %370 = sbr.rel (%p368) target = $region72
        $region71: #{tpu_custom_call.1} parent=55 // pred_region
          %371 = dma.done [#allocation9], 1024
        $region72: #{tpu_custom_call.1} parent=55 // pred_fallthru
          _
        // Predicated region
        $region73: #{tpu_custom_call.1} parent=55 // pred_check
          %p372 = pneg %p196
        $region74: #{tpu_custom_call.1} parent=55 // pred_check_branch
          %374 = sbr.rel (%p372) target = $region76
        $region75: #{tpu_custom_call.1} parent=55 // pred_region
          %375 = dma.done [#allocation9], 1024
        $region76: #{tpu_custom_call.1} parent=55 // pred_fallthru
          _
        %s376 = sand.u32 %s36, 1
        %s377 = scalar_lea.sflag [#allocation3], %s376
        %s378 = sand.u32 %s36, 1
        %s379 = smul.addr %s378, 4
        %s380 = scalar_lea.vmem [#allocation2], %s379
        %p381 = pneg %p49
        %p382 = pneg %p46
        %p383 = pneg %p70
        %p384 = pneg %p67
        %p385 = pneg %p91
        %p386 = pneg %p88
        %p387 = pneg %p112
        %p388 = pneg %p109
        %p389 = pneg %p133
        %p390 = pneg %p130
        %p391 = pneg %p154
        %p392 = pneg %p151
        %p393 = pneg %p175
        %p394 = pneg %p172
        %p395 = pneg %p196
        %p396 = pneg %p193
        %p397 = pneg %p217
        %p398 = pneg %p214
        %p399 = pneg %p243
        %p400 = pneg %p240
        %s401 = sand.u32 %s230, 1
        %s402 = scalar_lea.sflag [#allocation4], %s401
        %s403 = sand.u32 %s230, 1
        %s404 = smul.addr %s403, 8
        %s405 = scalar_lea.vmem [#allocation11], %s404
        %v407 = vld [vmem:[%s355] sm:$0xf]
        %v408 = vld [vmem:[#allocation7] sm:$0xf]
        %v409 = vld [vmem:[#allocation7 + $0x4] sm:$0xf]
        %v410 = vld [vmem:[#allocation7 + $0x8] sm:$0xf]
        %v411 = vld [vmem:[#allocation7 + $0xc] sm:$0xf]
        %v412 = vld [vmem:[#allocation7 + $0x10] sm:$0xf]
        %v413 = vld [vmem:[#allocation7 + $0x14] sm:$0xf]
        %v414 = vld [vmem:[#allocation7 + $0x18] sm:$0xf]
        %v415 = vld [vmem:[#allocation7 + $0x1c] sm:$0xf]
        %v416 = vld [vmem:[#allocation7 + $0x20] sm:$0xf]
        %v417 = vld [vmem:[#allocation7 + $0x24] sm:$0xf]
        %v418 = vld [vmem:[#allocation7 + $0x28] sm:$0xf]
        %v419 = vld [vmem:[#allocation7 + $0x2c] sm:$0xf]
        %v420 = vld [vmem:[#allocation7 + $0x30] sm:$0xf]
        %v421 = vld [vmem:[#allocation7 + $0x34] sm:$0xf]
        %v422 = vld [vmem:[#allocation7 + $0x38] sm:$0xf]
        %v423 = vld [vmem:[#allocation7 + $0x3c] sm:$0xf]
        %v424 = vld [vmem:[%s5] sm:$0x1]
        %v426 = vlaneseq
        %v427 = vshrl.u32 %v426, 7
        %v428 = vsub.s32 0, %v427
        %v429 = vrot.slane %v424, %v428
        %v447 = vunpack.c.l.b16 %v408
        %v448 = vunpack.c.l.b16 %v409
        %v449 = vunpack.c.l.b16 %v410
        %v450 = vunpack.c.l.b16 %v411
        %v451 = vunpack.c.l.b16 %v412
        %v452 = vunpack.c.l.b16 %v413
        %v453 = vunpack.c.l.b16 %v414
        %v454 = vunpack.c.l.b16 %v415
        %v455 = vunpack.c.l.b16 %v416
        %v456 = vunpack.c.l.b16 %v417
        %v457 = vunpack.c.l.b16 %v418
        %v458 = vunpack.c.l.b16 %v419
        %v459 = vunpack.c.l.b16 %v420
        %v460 = vunpack.c.l.b16 %v421
        %v461 = vunpack.c.l.b16 %v422
        %v462 = vunpack.c.l.b16 %v423
        %v463 = vpack.c.b16 %v448, %v447
        %v464 = vpack.c.b16 %v450, %v449
        %v465 = vpack.c.b16 %v452, %v451
        %v466 = vpack.c.b16 %v454, %v453
        %v467 = vpack.c.b16 %v456, %v455
        %v468 = vpack.c.b16 %v458, %v457
        %v469 = vpack.c.b16 %v460, %v459
        %v470 = vpack.c.b16 %v462, %v461
        %479 = vmatprep.subr.bf16.mxu0 0
        %480 = vmatpush1.bf16.msra.mxu0 %v470
        %481 = vmatprep.subr.bf16.mxu0 0
        %482 = vmatpush1.bf16.msra.mxu0 %v469
        %483 = vmatprep.subr.bf16.mxu0 0
        %484 = vmatpush1.bf16.msra.mxu0 %v468
        %485 = vmatprep.subr.bf16.mxu0 0
        %486 = vmatpush1.bf16.msra.mxu0 %v467
        %487 = vmatprep.subr.bf16.mxu0 0
        %488 = vmatpush1.bf16.msra.mxu0 %v466
        %489 = vmatprep.subr.bf16.mxu0 0
        %490 = vmatpush1.bf16.msra.mxu0 %v465
        %491 = vmatprep.subr.bf16.mxu0 0
        %492 = vmatpush1.bf16.msra.mxu0 %v464
        %493 = vmatprep.subr.bf16.mxu0 0
        %494 = vmatpush1.bf16.msra.mxu0 %v463
        %495 = vmatprep.subr.bf16.mxu0 0
        %496 = vmatpush2.bf16.msra.mxu0 0
        %497 = vmatprep.subr.bf16.mxu0 0
        %498 = vmatpush2.bf16.msra.mxu0 0
        %499 = vmatprep.subr.bf16.mxu0 0
        %500 = vmatpush2.bf16.msra.mxu0 0
        %501 = vmatprep.subr.bf16.mxu0 0
        %502 = vmatpush2.bf16.msra.mxu0 0
        %503 = vmatprep.subr.bf16.mxu0 0
        %504 = vmatpush2.bf16.msra.mxu0 0
        %505 = vmatprep.subr.bf16.mxu0 0
        %506 = vmatpush2.bf16.msra.mxu0 0
        %507 = vmatprep.subr.bf16.mxu0 0
        %508 = vmatpush2.bf16.msra.mxu0 0
        %509 = vmatprep.subr.bf16.mxu0 0
        %510 = vmatpush2.bf16.msra.mxu0 0
        %511 = vmatprep.mubr.bf16.mxu0 0
        %512 = vmatmul.mubr.bf16.gmra.mxu0 %v407
        %v513 = vpop.f32.mrf.mxu0
        %v514 = vadd.f32 %v429, %v513
        %v515 = vpop.f32.mrf.mxu0
        %v516 = vpop.f32.mrf.mxu0
        %v517 = vpop.f32.mrf.mxu0
        %518 = vdwg.mxu0
        %v519 = vld [vmem:[#allocation8] sm:$0xf]
        %v520 = vld [vmem:[#allocation8 + $0x4] sm:$0xf]
        %v521 = vld [vmem:[#allocation8 + $0x8] sm:$0xf]
        %v522 = vld [vmem:[#allocation8 + $0xc] sm:$0xf]
        %v523 = vld [vmem:[#allocation8 + $0x10] sm:$0xf]
        %v524 = vld [vmem:[#allocation8 + $0x14] sm:$0xf]
        %v525 = vld [vmem:[#allocation8 + $0x18] sm:$0xf]
        %v526 = vld [vmem:[#allocation8 + $0x1c] sm:$0xf]
        %v527 = vld [vmem:[#allocation8 + $0x20] sm:$0xf]
        %v528 = vld [vmem:[#allocation8 + $0x24] sm:$0xf]
        %v529 = vld [vmem:[#allocation8 + $0x28] sm:$0xf]
        %v530 = vld [vmem:[#allocation8 + $0x2c] sm:$0xf]
        %v531 = vld [vmem:[#allocation8 + $0x30] sm:$0xf]
        %v532 = vld [vmem:[#allocation8 + $0x34] sm:$0xf]
        %v533 = vld [vmem:[#allocation8 + $0x38] sm:$0xf]
        %v534 = vld [vmem:[#allocation8 + $0x3c] sm:$0xf]
        %v535 = vld [vmem:[%s6] sm:$0x1]
        %v537 = vlaneseq
        %v538 = vshrl.u32 %v537, 7
        %v539 = vsub.s32 0, %v538
        %v540 = vrot.slane %v535, %v539
        %v558 = vunpack.c.l.b16 %v519
        %v559 = vunpack.c.l.b16 %v520
        %v560 = vunpack.c.l.b16 %v521
        %v561 = vunpack.c.l.b16 %v522
        %v562 = vunpack.c.l.b16 %v523
        %v563 = vunpack.c.l.b16 %v524
        %v564 = vunpack.c.l.b16 %v525
        %v565 = vunpack.c.l.b16 %v526
        %v566 = vunpack.c.l.b16 %v527
        %v567 = vunpack.c.l.b16 %v528
        %v568 = vunpack.c.l.b16 %v529
        %v569 = vunpack.c.l.b16 %v530
        %v570 = vunpack.c.l.b16 %v531
        %v571 = vunpack.c.l.b16 %v532
        %v572 = vunpack.c.l.b16 %v533
        %v573 = vunpack.c.l.b16 %v534
        %v574 = vpack.c.b16 %v559, %v558
        %v575 = vpack.c.b16 %v561, %v560
        %v576 = vpack.c.b16 %v563, %v562
        %v577 = vpack.c.b16 %v565, %v564
        %v578 = vpack.c.b16 %v567, %v566
        %v579 = vpack.c.b16 %v569, %v568
        %v580 = vpack.c.b16 %v571, %v570
        %v581 = vpack.c.b16 %v573, %v572
        %590 = vmatprep.subr.bf16.mxu0 0
        %591 = vmatpush1.bf16.msra.mxu0 %v581
        %592 = vmatprep.subr.bf16.mxu0 0
        %593 = vmatpush1.bf16.msra.mxu0 %v580
        %594 = vmatprep.subr.bf16.mxu0 0
        %595 = vmatpush1.bf16.msra.mxu0 %v579
        %596 = vmatprep.subr.bf16.mxu0 0
        %597 = vmatpush1.bf16.msra.mxu0 %v578
        %598 = vmatprep.subr.bf16.mxu0 0
        %599 = vmatpush1.bf16.msra.mxu0 %v577
        %600 = vmatprep.subr.bf16.mxu0 0
        %601 = vmatpush1.bf16.msra.mxu0 %v576
        %602 = vmatprep.subr.bf16.mxu0 0
        %603 = vmatpush1.bf16.msra.mxu0 %v575
        %604 = vmatprep.subr.bf16.mxu0 0
        %605 = vmatpush1.bf16.msra.mxu0 %v574
        %606 = vmatprep.subr.bf16.mxu0 0
        %607 = vmatpush2.bf16.msra.mxu0 0
        %608 = vmatprep.subr.bf16.mxu0 0
        %609 = vmatpush2.bf16.msra.mxu0 0
        %610 = vmatprep.subr.bf16.mxu0 0
        %611 = vmatpush2.bf16.msra.mxu0 0
        %612 = vmatprep.subr.bf16.mxu0 0
        %613 = vmatpush2.bf16.msra.mxu0 0
        %614 = vmatprep.subr.bf16.mxu0 0
        %615 = vmatpush2.bf16.msra.mxu0 0
        %616 = vmatprep.subr.bf16.mxu0 0
        %617 = vmatpush2.bf16.msra.mxu0 0
        %618 = vmatprep.subr.bf16.mxu0 0
        %619 = vmatpush2.bf16.msra.mxu0 0
        %620 = vmatprep.subr.bf16.mxu0 0
        %621 = vmatpush2.bf16.msra.mxu0 0
        %622 = vmatprep.mubr.bf16.mxu0 0
        %623 = vmatmul.mubr.bf16.gmra.mxu0 %v407
        %v624 = vpop.f32.mrf.mxu0
        %v625 = vadd.f32 %v540, %v624
        %v626 = vpop.f32.mrf.mxu0
        %v627 = vpop.f32.mrf.mxu0
        %v628 = vpop.f32.mrf.mxu0
        %629 = vdwg.mxu0
        %v630 = vmul.f32 %v514, %v514
        %631 = vadd.xlane.f32.xlu0 %v630
        %v632 = vpop.xlane.xlu0 %631
        %v633 = vrsqrt.pop %v632
        %v634 = vmul.f32 %v514, %v633
        %v635 = vmul.f32 %v634, %v625
        %v636 = vrot.slane %v635, 4
        %v637 = vadd.f32 %v635, %v636
        %v638 = vrot.slane %v637, 2
        %v639 = vadd.f32 %v637, %v638
        %v640 = vrot.slane %v639, 1
        %v641 = vadd.f32 %v639, %v640
        %v642 = vld [vmem:[#allocation5] sm:$0xf]
        %v643 = vld [vmem:[#allocation5 + $0x4] sm:$0xf]
        %v644 = vld [vmem:[#allocation5 + $0x8] sm:$0xf]
        %v645 = vld [vmem:[#allocation5 + $0xc] sm:$0xf]
        %v646 = vld [vmem:[#allocation5 + $0x10] sm:$0xf]
        %v647 = vld [vmem:[#allocation5 + $0x14] sm:$0xf]
        %v648 = vld [vmem:[#allocation5 + $0x18] sm:$0xf]
        %v649 = vld [vmem:[#allocation5 + $0x1c] sm:$0xf]
        %v650 = vld [vmem:[#allocation5 + $0x20] sm:$0xf]
        %v651 = vld [vmem:[#allocation5 + $0x24] sm:$0xf]
        %v652 = vld [vmem:[#allocation5 + $0x28] sm:$0xf]
        %v653 = vld [vmem:[#allocation5 + $0x2c] sm:$0xf]
        %v654 = vld [vmem:[#allocation5 + $0x30] sm:$0xf]
        %v655 = vld [vmem:[#allocation5 + $0x34] sm:$0xf]
        %v656 = vld [vmem:[#allocation5 + $0x38] sm:$0xf]
        %v657 = vld [vmem:[#allocation5 + $0x3c] sm:$0xf]
        %v658 = vld [vmem:[%s4] sm:$0x1]
        %v660 = vlaneseq
        %v661 = vshrl.u32 %v660, 7
        %v662 = vsub.s32 0, %v661
        %v663 = vrot.slane %v658, %v662
        %v681 = vunpack.c.l.b16 %v642
        %v682 = vunpack.c.l.b16 %v643
        %v683 = vunpack.c.l.b16 %v644
        %v684 = vunpack.c.l.b16 %v645
        %v685 = vunpack.c.l.b16 %v646
        %v686 = vunpack.c.l.b16 %v647
        %v687 = vunpack.c.l.b16 %v648
        %v688 = vunpack.c.l.b16 %v649
        %v689 = vunpack.c.l.b16 %v650
        %v690 = vunpack.c.l.b16 %v651
        %v691 = vunpack.c.l.b16 %v652
        %v692 = vunpack.c.l.b16 %v653
        %v693 = vunpack.c.l.b16 %v654
        %v694 = vunpack.c.l.b16 %v655
        %v695 = vunpack.c.l.b16 %v656
        %v696 = vunpack.c.l.b16 %v657
        %v697 = vpack.c.b16 %v682, %v681
        %v698 = vpack.c.b16 %v684, %v683
        %v699 = vpack.c.b16 %v686, %v685
        %v700 = vpack.c.b16 %v688, %v687
        %v701 = vpack.c.b16 %v690, %v689
        %v702 = vpack.c.b16 %v692, %v691
        %v703 = vpack.c.b16 %v694, %v693
        %v704 = vpack.c.b16 %v696, %v695
        %713 = vmatprep.subr.bf16.mxu0 0
        %714 = vmatpush1.bf16.msra.mxu0 %v704
        %715 = vmatprep.subr.bf16.mxu0 0
        %716 = vmatpush1.bf16.msra.mxu0 %v703
        %717 = vmatprep.subr.bf16.mxu0 0
        %718 = vmatpush1.bf16.msra.mxu0 %v702
        %719 = vmatprep.subr.bf16.mxu0 0
        %720 = vmatpush1.bf16.msra.mxu0 %v701
        %721 = vmatprep.subr.bf16.mxu0 0
        %722 = vmatpush1.bf16.msra.mxu0 %v700
        %723 = vmatprep.subr.bf16.mxu0 0
        %724 = vmatpush1.bf16.msra.mxu0 %v699
        %725 = vmatprep.subr.bf16.mxu0 0
        %726 = vmatpush1.bf16.msra.mxu0 %v698
        %727 = vmatprep.subr.bf16.mxu0 0
        %728 = vmatpush1.bf16.msra.mxu0 %v697
        %729 = vmatprep.subr.bf16.mxu0 0
        %730 = vmatpush2.bf16.msra.mxu0 0
        %731 = vmatprep.subr.bf16.mxu0 0
        %732 = vmatpush2.bf16.msra.mxu0 0
        %733 = vmatprep.subr.bf16.mxu0 0
        %734 = vmatpush2.bf16.msra.mxu0 0
        %735 = vmatprep.subr.bf16.mxu0 0
        %736 = vmatpush2.bf16.msra.mxu0 0
        %737 = vmatprep.subr.bf16.mxu0 0
        %738 = vmatpush2.bf16.msra.mxu0 0
        %739 = vmatprep.subr.bf16.mxu0 0
        %740 = vmatpush2.bf16.msra.mxu0 0
        %741 = vmatprep.subr.bf16.mxu0 0
        %742 = vmatpush2.bf16.msra.mxu0 0
        %743 = vmatprep.subr.bf16.mxu0 0
        %744 = vmatpush2.bf16.msra.mxu0 0
        %745 = vmatprep.mubr.bf16.mxu0 0
        %746 = vmatmul.mubr.bf16.gmra.mxu0 %v407
        %v747 = vpop.f32.mrf.mxu0
        %v748 = vadd.f32 %v663, %v747
        %v749 = vpop.f32.mrf.mxu0
        %v750 = vpop.f32.mrf.mxu0
        %v751 = vpop.f32.mrf.mxu0
        %752 = vdwg.mxu0
        %v753 = vmul.f32 %v748, %v748
        %754 = vadd.xlane.f32.xlu0 %v753
        %v755 = vpop.xlane.xlu0 %754
        %v756 = vrsqrt.pop %v755
        %v757 = vmul.f32 %v748, %v756
        %v758 = vpack.c.bf16 %v641, %v641
        %v759 = vpack.c.bf16 %v757, %v757
        %v760 = vmul.bf16 %v758, %v759
        %v761 = vld [vmem:[#allocation10] sm:$0xf]
        %v762 = vld [vmem:[#allocation10 + $0x4] sm:$0xf]
        %v763 = vld [vmem:[#allocation10 + $0x8] sm:$0xf]
        %v764 = vld [vmem:[#allocation10 + $0xc] sm:$0xf]
        %v765 = vld [vmem:[#allocation10 + $0x10] sm:$0xf]
        %v766 = vld [vmem:[#allocation10 + $0x14] sm:$0xf]
        %v767 = vld [vmem:[#allocation10 + $0x18] sm:$0xf]
        %v768 = vld [vmem:[#allocation10 + $0x1c] sm:$0xf]
        %v769 = vld [vmem:[#allocation10 + $0x20] sm:$0xf]
        %v770 = vld [vmem:[#allocation10 + $0x24] sm:$0xf]
        %v771 = vld [vmem:[#allocation10 + $0x28] sm:$0xf]
        %v772 = vld [vmem:[#allocation10 + $0x2c] sm:$0xf]
        %v773 = vld [vmem:[#allocation10 + $0x30] sm:$0xf]
        %v774 = vld [vmem:[#allocation10 + $0x34] sm:$0xf]
        %v775 = vld [vmem:[#allocation10 + $0x38] sm:$0xf]
        %v776 = vld [vmem:[#allocation10 + $0x3c] sm:$0xf]
        %v777 = vld [vmem:[%s8] sm:$0x1]
        %v779 = vlaneseq
        %v780 = vshrl.u32 %v779, 7
        %v781 = vsub.s32 0, %v780
        %v782 = vrot.slane %v777, %v781
        %v800 = vunpack.c.l.b16 %v761
        %v801 = vunpack.c.l.b16 %v762
        %v802 = vunpack.c.l.b16 %v763
        %v803 = vunpack.c.l.b16 %v764
        %v804 = vunpack.c.l.b16 %v765
        %v805 = vunpack.c.l.b16 %v766
        %v806 = vunpack.c.l.b16 %v767
        %v807 = vunpack.c.l.b16 %v768
        %v808 = vunpack.c.l.b16 %v769
        %v809 = vunpack.c.l.b16 %v770
        %v810 = vunpack.c.l.b16 %v771
        %v811 = vunpack.c.l.b16 %v772
        %v812 = vunpack.c.l.b16 %v773
        %v813 = vunpack.c.l.b16 %v774
        %v814 = vunpack.c.l.b16 %v775
        %v815 = vunpack.c.l.b16 %v776
        %v816 = vpack.c.b16 %v801, %v800
        %v817 = vpack.c.b16 %v803, %v802
        %v818 = vpack.c.b16 %v805, %v804
        %v819 = vpack.c.b16 %v807, %v806
        %v820 = vpack.c.b16 %v809, %v808
        %v821 = vpack.c.b16 %v811, %v810
        %v822 = vpack.c.b16 %v813, %v812
        %v823 = vpack.c.b16 %v815, %v814
        %832 = vmatprep.subr.bf16.mxu0 0
        %833 = vmatpush1.bf16.msra.mxu0 %v823
        %834 = vmatprep.subr.bf16.mxu0 0
        %835 = vmatpush1.bf16.msra.mxu0 %v822
        %836 = vmatprep.subr.bf16.mxu0 0
        %837 = vmatpush1.bf16.msra.mxu0 %v821
        %838 = vmatprep.subr.bf16.mxu0 0
        %839 = vmatpush1.bf16.msra.mxu0 %v820
        %840 = vmatprep.subr.bf16.mxu0 0
        %841 = vmatpush1.bf16.msra.mxu0 %v819
        %842 = vmatprep.subr.bf16.mxu0 0
        %843 = vmatpush1.bf16.msra.mxu0 %v818
        %844 = vmatprep.subr.bf16.mxu0 0
        %845 = vmatpush1.bf16.msra.mxu0 %v817
        %846 = vmatprep.subr.bf16.mxu0 0
        %847 = vmatpush1.bf16.msra.mxu0 %v816
        %848 = vmatprep.subr.bf16.mxu0 0
        %849 = vmatpush2.bf16.msra.mxu0 0
        %850 = vmatprep.subr.bf16.mxu0 0
        %851 = vmatpush2.bf16.msra.mxu0 0
        %852 = vmatprep.subr.bf16.mxu0 0
        %853 = vmatpush2.bf16.msra.mxu0 0
        %854 = vmatprep.subr.bf16.mxu0 0
        %855 = vmatpush2.bf16.msra.mxu0 0
        %856 = vmatprep.subr.bf16.mxu0 0
        %857 = vmatpush2.bf16.msra.mxu0 0
        %858 = vmatprep.subr.bf16.mxu0 0
        %859 = vmatpush2.bf16.msra.mxu0 0
        %860 = vmatprep.subr.bf16.mxu0 0
        %861 = vmatpush2.bf16.msra.mxu0 0
        %862 = vmatprep.subr.bf16.mxu0 0
        %863 = vmatpush2.bf16.msra.mxu0 0
        %864 = vmatprep.mubr.bf16.mxu0 0
        %865 = vmatmul.mubr.bf16.gmra.mxu0 %v760
        %v866 = vpop.f32.mrf.mxu0
        %v867 = vadd.f32 %v782, %v866
        %v868 = vpop.f32.mrf.mxu0
        %v869 = vpop.f32.mrf.mxu0
        %v870 = vpop.f32.mrf.mxu0
        %871 = vdwg.mxu0
        %872 = vst [vmem:[%s405] sm:$0xff] %v867
        %s873 = sand.u32 %s230, 1
        %s874 = scalar_lea.sflag [#allocation4], %s873
        %s875 = sand.u32 %s230, 1
        %s876 = smul.addr %s875, 8
        %s877 = scalar_lea.vmem [#allocation11], %s876
        // Predicated region
        $region77: #{tpu_custom_call.1} parent=55 // pred_check
          %p878 = pneg %p240
        $region78: #{tpu_custom_call.1} parent=55 // pred_check_branch
          %880 = sbr.rel (%p878) target = $region80
        $region79: #{tpu_custom_call.1} parent=55 // pred_region
          %s882 = ssub.s32 128, 128
          %883 = vsyncadd %s874, %s882
          %s884 = smul.addr %s28, 128
          %s885 = scalar_lea.hbm %s9, %s884
          %s887 = sshll.u32 %s877, 4
          %s888 = int_to_ptr.vmem [resolvable:$true] %s887
          %890 = dma.vmem_to_hbm [thread:$0]  %s888, 128, %s885, %s874
        $region80: #{tpu_custom_call.1} parent=55 // pred_fallthru
          _
      $region56: #{tpu_custom_call.1} parent=5 // pred_fallthru
        _
      %p891 = scmp.le.s32.totalorder 2, %s23
      // Predicated region
      $region81: #{tpu_custom_call.1} parent=5 // pred_check
        %p892 = pneg %p891
      $region82: #{tpu_custom_call.1} parent=5 // pred_check_branch
        %894 = sbr.rel (%p892) target = $region84
      $region83: #{tpu_custom_call.1} parent=5 // pred_region
        %s895 = ssub.s32 %s23, 2
        // Predicated region
        $region85: #{tpu_custom_call.1} parent=83 // pred_check
          %p896 = pneg %p246
        $region86: #{tpu_custom_call.1} parent=83 // pred_check_branch
          %898 = sbr.rel (%p896) target = $region88
        $region87: #{tpu_custom_call.1} parent=83 // pred_region
          %s899 = sand.u32 %s231, 1
          %s900 = scalar_lea.sflag [#allocation4], %s899
          %s901 = sand.u32 %s231, 1
          %s902 = smul.addr %s901, 8
          %s903 = scalar_lea.vmem [#allocation11], %s902
          %904 = dma.done %s900, 128
        $region88: #{tpu_custom_call.1} parent=83 // pred_fallthru
          _
      $region84: #{tpu_custom_call.1} parent=5 // pred_fallthru
        _
    $region6: #{tpu_custom_call.1} parent=1 // loop_footer
      %s27 = sadd.s32 1, %s23
    $region7: #{tpu_custom_call.1} parent=1 // loop_footer_branch
      %22 = sbr.rel target = $region3
    $region8: #{tpu_custom_call.1} parent=1 // loop_exit
      _
    %905 = vsyncpa [#allocation3], 1
    %s906 = scalar_lea.sflag [#allocation3], 1
    %907 = vsyncpa %s906, 1
    %908 = vsyncpa [#allocation6], 1
    %909 = vsyncpa [#allocation9], 1
    %910 = vsyncpa [#allocation4], 1
    %s911 = scalar_lea.sflag [#allocation4], 1
    %912 = vsyncpa %s911, 1

</llo_original>
